<compile_context>
chip_gen: v6e
topology: v6e:2x2x1
jax: 0.10.0
libtpu: 0.0.40
codegen_flags: <defaults>
</compile_context>

<pallas_src>
import functools

import numpy as np
import jax
import jax.numpy as jnp
from jax.experimental import pallas as pl
from jax.experimental.pallas import tpu as pltpu


# ----------------------------------------------------------------------------
# Fused kernel body (one block of G lane-packed images per grid step).
#
# Lane layout: L = G * (H+2) * (W+2)  (per-image zero-padded spatial, flattened,
# images concatenated along lanes).  Channels live on sublanes.
#   x_ref      (Cin,  L)      bf16   zero-padded input
#   w1t_ref    (Ch,   Cin)    bf16   1x1 expand weight, BN scale folded
#   b1_ref     (Ch,   1)      f32
#   wdw_ref    (Ch,   9)      f32    3x3 depthwise weight, BN scale folded
#   b2_ref     (Ch,   1)      f32
#   w3t_ref    (Cout, Ch)     bf16   1x1 projection weight, BN scale folded
#   b3_ref     (Cout, 1)      f32
#   border_ref (1,    L)      f32    1 at interior pixels, 0 on the halo border
#   sel_ref    (L,    Lo)     bf16   0/1 strided interior selection (stride>1)
#   o_ref      (Cout, Lo)     f32    Lo = L (stride 1) or G*Ho*Wo (stride>1)
# ----------------------------------------------------------------------------
def _bottleneck_body(x_ref, w1t_ref, b1_ref, wdw_ref, b2_ref, w3t_ref, b3_ref,
                     border_ref, sel_ref, o_ref, *, Wp, use_shortcut):
    L = x_ref.shape[-1]
    xb = x_ref[...]                                        # (Cin, L) bf16

    # --- 1x1 expand conv (+ folded BN) on the MXU: bf16 ops, f32 accumulate ---
    h = jnp.dot(w1t_ref[...], xb, preferred_element_type=jnp.float32)
    h = jnp.maximum(h + b1_ref[...], 0.0)                  # bias + ReLU (f32)
    h = h * border_ref[...]                                # re-zero halo once

    # --- 3x3 depthwise conv (stride 1) as 9 plain lane rotations.
    #     Halo pixels are zero, so no per-tap masking is needed; roll wrap only
    #     contaminates halo outputs, which are never read. ---
    wdw = wdw_ref[...]                                     # (Ch, 9)
    acc = h * wdw[:, 4:5]                                  # center tap init
    for k in range(9):
        if k == 4:
            continue
        dh, dw = k // 3 - 1, k % 3 - 1
        s = dh * Wp + dw                                   # flat (padded) offset
        acc = acc + pltpu.roll(h, (-s) % L, axis=1) * wdw[:, k:k + 1]

    # --- stride-s subsample (interior strided positions) as a 0/1 selection
    #     matmul, applied BEFORE bias+ReLU (they commute with column selection);
    #     bf16 operands, f32 accumulation ---
    if sel_ref is not None:
        acc = jnp.dot(acc.astype(jnp.bfloat16), sel_ref[...],
                      preferred_element_type=jnp.float32)  # (Ch, Lo)
    d = jnp.maximum(acc + b2_ref[...], 0.0)                # bias + ReLU (small)

    # --- 1x1 projection conv (+ folded BN), no activation ---
    y = jnp.dot(w3t_ref[...], d.astype(jnp.bfloat16),
                preferred_element_type=jnp.float32) + b3_ref[...]
    if use_shortcut:                                       # stride==1, Cin==Cout
        y = y + xb.astype(jnp.float32)
    o_ref[...] = y


def _kernel_stride1(x_ref, w1t, b1, wdw, b2, w3t, b3, border, o_ref,
                    *, Wp, use_shortcut):
    _bottleneck_body(x_ref, w1t, b1, wdw, b2, w3t, b3, border, None, o_ref,
                     Wp=Wp, use_shortcut=use_shortcut)


def _kernel_strided(x_ref, w1t, b1, wdw, b2, w3t, b3, border, sel, o_ref, *, Wp):
    _bottleneck_body(x_ref, w1t, b1, wdw, b2, w3t, b3, border, sel, o_ref,
                     Wp=Wp, use_shortcut=False)


# ----------------------------------------------------------------------------
# Cached host-side constants (vectorized numpy, no per-call Python loops)
# ----------------------------------------------------------------------------
@functools.lru_cache(maxsize=None)
def _border_mask(H, W, G):
    Hp, Wp = H + 2, W + 2
    m = np.zeros((Hp, Wp), np.float32)
    m[1:-1, 1:-1] = 1.0
    return np.tile(m.reshape(-1), G)[None, :]              # (1, G*Hp*Wp)


@functools.lru_cache(maxsize=None)
def _stride_sel(H, W, stride, G):
    Hp, Wp = H + 2, W + 2
    P = Hp * Wp
    Ho = (H - 1) // stride + 1
    Wo = (W - 1) // stride + 1
    rows = ((1 + stride * np.arange(Ho))[:, None] * Wp
            + (1 + stride * np.arange(Wo))[None, :]).reshape(-1)
    sel = np.zeros((P, Ho * Wo), np.float32)
    sel[rows, np.arange(Ho * Wo)] = 1.0
    # block-diagonal over the G lane-packed images
    return np.kron(np.eye(G, dtype=np.float32), sel)       # (G*P, G*Ho*Wo)


def _pick_pack(N, P, Cin, Ch, Cout):
    """Largest divisor of N so the packed lane dim stays modest and VMEM-safe."""
    best = 1
    for g in range(1, N + 1):
        if N % g:
            continue
        L = g * P
        est = 4 * L * (2 * Ch + Cout + Cin)
        if L > 8192 or est > 24 * (1 << 20):
            continue
        best = g
    return best


# ----------------------------------------------------------------------------
# Wrapper (NCHW in / NCHW out)
# ----------------------------------------------------------------------------
def linear_bottleneck_forward(x_nchw, params, *, stride, use_shortcut):
    N, Cin, H, W = x_nchw.shape
    Ch = params["w1"].shape[1]
    Cout = params["w3"].shape[1]
    if use_shortcut:
        assert stride == 1 and Cin == Cout
    Hp, Wp = H + 2, W + 2
    P = Hp * Wp
    Ho = (H - 1) // stride + 1
    Wo = (W - 1) // stride + 1

    G = _pick_pack(N, P, Cin, Ch, Cout)
    NB = N // G
    L = G * P
    Lo = L if stride == 1 else G * Ho * Wo

    # Fold eval-mode BatchNorm scales into the conv weights (biases stay).
    w1t = (params["w1"] * params["s1"]).T.astype(jnp.bfloat16)   # (Ch, Cin)
    b1 = params["b1"].T.astype(jnp.float32)                      # (Ch, 1)
    wdw = (params["wdw"] * params["s2"]).T.astype(jnp.float32)   # (Ch, 9)
    b2 = params["b2"].T.astype(jnp.float32)                      # (Ch, 1)
    w3t = (params["w3"] * params["s3"]).T.astype(jnp.bfloat16)   # (Cout, Ch)
    b3 = params["b3"].T.astype(jnp.float32)                      # (Cout, 1)

    # bf16 input, zero halo padding, and G-image lane packing.
    xb = x_nchw.astype(jnp.bfloat16)
    xp = jnp.pad(xb, ((0, 0), (0, 0), (1, 1), (1, 1)))           # (N,Cin,Hp,Wp)
    xp = (xp.reshape(NB, G, Cin, P).transpose(0, 2, 1, 3)
            .reshape(NB, Cin, L))                                # (NB,Cin,L)

    border = jnp.asarray(_border_mask(H, W, G))                  # (1, L) f32

    batch_spec = lambda shp: pl.BlockSpec((pl.Squeezed(),) + shp,
                                          lambda b: (b, 0, 0))
    full_spec = lambda shp: pl.BlockSpec(shp, lambda b: (0,) * len(shp))

    in_specs = [
        batch_spec((Cin, L)),             # x (bf16, padded, lane-packed)
        full_spec((Ch, Cin)),             # w1t
        full_spec((Ch, 1)),               # b1
        full_spec((Ch, 9)),               # wdw
        full_spec((Ch, 1)),               # b2
        full_spec((Cout, Ch)),            # w3t
        full_spec((Cout, 1)),             # b3
        full_spec((1, L)),                # border mask
    ]
    args = [xp, w1t, b1, wdw, b2, w3t, b3, border]

    if stride > 1:
        sel = jnp.asarray(_stride_sel(H, W, stride, G), dtype=jnp.bfloat16)
        in_specs.append(full_spec((L, Lo)))
        args.append(sel)
        kernel = functools.partial(_kernel_strided, Wp=Wp)
    else:
        kernel = functools.partial(_kernel_stride1, Wp=Wp,
                                   use_shortcut=use_shortcut)

    # Explicit VMEM budget (headroom below v7x's 64 MiB physical VMEM).
    vmem_est = (2 * Cin * L * 2                      # x, double-buffered bf16
                + (2 * Ch + Cout) * L * 4            # h / acc / y live f32
                + 2 * Cout * Lo * 4                  # output, double-buffered
                + (L * Lo * 2 if stride > 1 else 0)  # selection matrix bf16
                + (Ch * (Cin + 11) + Cout * (Ch + 1)) * 4
                + 2 * L * 4)                         # border mask
    vmem_limit = int(min(48 << 20, max(16 << 20, 6 * vmem_est)))

    out = pl.pallas_call(
        kernel,
        out_shape=jax.ShapeDtypeStruct((NB, Cout, Lo), jnp.float32),
        grid=(NB,),
        in_specs=in_specs,
        out_specs=batch_spec((Cout, Lo)),
        compiler_params=pltpu.CompilerParams(
            dimension_semantics=("parallel",),
            vmem_limit_bytes=vmem_limit),
    )(*args)

    # Unpack lanes back to NCHW (cheap XLA reshapes/transposes/slices).
    if stride == 1:
        out = (out.reshape(NB, Cout, G, Hp, Wp).transpose(0, 2, 1, 3, 4)
                  .reshape(N, Cout, Hp, Wp))[:, :, 1:-1, 1:-1]
    else:
        out = (out.reshape(NB, Cout, G, Ho, Wo).transpose(0, 2, 1, 3, 4)
                  .reshape(N, Cout, Ho, Wo))
    return out


# ----------------------------------------------------------------------------
# Deterministic parameter construction (synthetic weights, eval-mode BN fold)
# ----------------------------------------------------------------------------
def _bn_fold(key, c, eps=1e-5):
    k1, k2, k3, k4 = jax.random.split(key, 4)
    gamma = jax.random.uniform(k1, (c,), jnp.float32, 0.5, 1.5)
    beta = jax.random.normal(k2, (c,), jnp.float32) * 0.1
    mean = jax.random.normal(k3, (c,), jnp.float32) * 0.1
    var = jax.random.uniform(k4, (c,), jnp.float32, 0.5, 1.5)
    scale = gamma / jnp.sqrt(var + eps)
    bias = beta - mean * scale
    return scale.reshape(1, c), bias.reshape(1, c)


def init_params(key, in_channels, out_channels, t):
    Cin, Ch, Cout = in_channels, in_channels * t, out_channels
    ks = jax.random.split(key, 6)
    w1 = jax.random.normal(ks[0], (Cin, Ch), jnp.float32) / np.sqrt(Cin)
    wdw = jax.random.normal(ks[1], (9, Ch), jnp.float32) / 3.0     # (kh*3+kw, c)
    w3 = jax.random.normal(ks[2], (Ch, Cout), jnp.float32) / np.sqrt(Ch)
    s1, b1 = _bn_fold(ks[3], Ch)
    s2, b2 = _bn_fold(ks[4], Ch)
    s3, b3 = _bn_fold(ks[5], Cout)
    return dict(w1=w1, wdw=wdw, w3=w3, s1=s1, b1=b1, s2=s2, b2=b2, s3=s3, b3=b3)


# ----------------------------------------------------------------------------
# Plain-JAX reference (lax.conv, f32) for correctness checking
# ----------------------------------------------------------------------------
def ref_forward(x_nchw, params, *, stride, use_shortcut):
    x = jnp.transpose(x_nchw, (0, 2, 3, 1)).astype(jnp.float32)
    Ch = params["w1"].shape[1]
    dn = ("NHWC", "HWIO", "NHWC")
    h = jax.lax.conv_general_dilated(x, params["w1"][None, None], (1, 1),
                                     "VALID", dimension_numbers=dn)
    h = jnp.maximum(h * params["s1"] + params["b1"], 0.0)
    wdw = params["wdw"].reshape(3, 3, 1, Ch)
    h = jax.lax.conv_general_dilated(h, wdw, (stride, stride), ((1, 1), (1, 1)),
                                     dimension_numbers=dn, feature_group_count=Ch)
    h = jnp.maximum(h * params["s2"] + params["b2"], 0.0)
    y = jax.lax.conv_general_dilated(h, params["w3"][None, None], (1, 1),
                                     "VALID", dimension_numbers=dn)
    y = y * params["s3"] + params["b3"]
    if use_shortcut:
        y = y + x
    return jnp.transpose(y, (0, 3, 1, 2))


if __name__ == "__main__":
    key = jax.random.PRNGKey(0)
    kx, kp1, kp2 = jax.random.split(key, 3)

    # PyTorch-style NCHW input: batch=2, in_channels=4, spatial=16x16
    x = jax.random.normal(kx, (2, 4, 16, 16), jnp.float32)

    # Config 1: LinearBottleneck(4, 4, t=6, stride=1) -> residual shortcut path
    p1 = init_params(kp1, 4, 4, 6)
    out1 = linear_bottleneck_forward(x, p1, stride=1, use_shortcut=True)
    jax.block_until_ready(out1)
    ref1 = ref_forward(x, p1, stride=1, use_shortcut=True)
    assert out1.shape == (2, 4, 16, 16)
    np.testing.assert_allclose(np.asarray(out1), np.asarray(ref1),
                               rtol=5e-2, atol=1e-1)   # bf16 inputs/weights

    # Config 2: LinearBottleneck(4, 8, t=6, stride=2) -> default stride, no shortcut
    p2 = init_params(kp2, 4, 8, 6)
    out2 = linear_bottleneck_forward(x, p2, stride=2, use_shortcut=False)
    jax.block_until_ready(out2)
    ref2 = ref_forward(x, p2, stride=2, use_shortcut=False)
    assert out2.shape == (2, 8, 8, 8)
    np.testing.assert_allclose(np.asarray(out2), np.asarray(ref2),
                               rtol=5e-2, atol=1e-1)

    print("KERNEL_OK")
</pallas_src>

<mosaic_0001>
module attributes {stable_mosaic.version = 11 : i64} {
  func.func @_kernel_stride1(%arg0: i32, %arg1: memref<1x4x648xbf16, #tpu.memory_space<vmem>>, %arg2: memref<24x4xbf16, #tpu.memory_space<vmem>>, %arg3: memref<24x1xf32, #tpu.memory_space<vmem>>, %arg4: memref<24x9xf32, #tpu.memory_space<vmem>>, %arg5: memref<24x1xf32, #tpu.memory_space<vmem>>, %arg6: memref<4x24xbf16, #tpu.memory_space<vmem>>, %arg7: memref<4x1xf32, #tpu.memory_space<vmem>>, %arg8: memref<1x648xf32, #tpu.memory_space<vmem>>, %arg9: memref<1x4x648xf32, #tpu.memory_space<vmem>>) attributes {dimension_semantics = [#tpu.dimension_semantics<parallel>], iteration_bounds = array<i64: 1>, scalar_prefetch = 0 : i64, scratch_operands = 0 : i64, tpu.core_type = #tpu.core_type<tc>, window_params = [{transform_indices = @transform_0, window_bounds = array<i64: 1, 4, 648>}, {pipeline_mode = #tpu.pipeline_mode<synchronous>, transform_indices = @transform_1, window_bounds = array<i64: 24, 4>}, {pipeline_mode = #tpu.pipeline_mode<synchronous>, transform_indices = @transform_2, window_bounds = array<i64: 24, 1>}, {pipeline_mode = #tpu.pipeline_mode<synchronous>, transform_indices = @transform_3, window_bounds = array<i64: 24, 9>}, {pipeline_mode = #tpu.pipeline_mode<synchronous>, transform_indices = @transform_4, window_bounds = array<i64: 24, 1>}, {pipeline_mode = #tpu.pipeline_mode<synchronous>, transform_indices = @transform_5, window_bounds = array<i64: 4, 24>}, {pipeline_mode = #tpu.pipeline_mode<synchronous>, transform_indices = @transform_6, window_bounds = array<i64: 4, 1>}, {pipeline_mode = #tpu.pipeline_mode<synchronous>, transform_indices = @transform_7, window_bounds = array<i64: 1, 648>}, {transform_indices = @transform_8, window_bounds = array<i64: 1, 4, 648>}]} {
    %c0 = arith.constant 0 : index
    %c0_0 = arith.constant 0 : index
    %c0_1 = arith.constant 0 : index
    %0 = vector.load %arg1[%c0, %c0_0, %c0_1] : memref<1x4x648xbf16, #tpu.memory_space<vmem>>, vector<1x4x648xbf16>
    %1 = vector.shape_cast %0 : vector<1x4x648xbf16> to vector<4x648xbf16>
    %c0_2 = arith.constant 0 : index
    %c0_3 = arith.constant 0 : index
    %2 = vector.load %arg2[%c0_2, %c0_3] : memref<24x4xbf16, #tpu.memory_space<vmem>>, vector<24x4xbf16>
    %cst = arith.constant dense<0.000000e+00> : vector<24x648xf32>
    %3 = tpu.matmul %2, %1, %cst {dimension_numbers = #tpu.dot_dimension_numbers<[1], [0], [0], [1], [0, 0, 1, 1], [], []>} : vector<24x4xbf16>, vector<4x648xbf16>, vector<24x648xf32> -> vector<24x648xf32>
    %c0_4 = arith.constant 0 : index
    %c0_5 = arith.constant 0 : index
    %4 = vector.load %arg3[%c0_4, %c0_5] : memref<24x1xf32, #tpu.memory_space<vmem>>, vector<24x1xf32>
    %5 = vector.broadcast %4 : vector<24x1xf32> to vector<24x648xf32>
    %6 = arith.addf %3, %5 : vector<24x648xf32>
    %cst_6 = arith.constant 0.000000e+00 : f32
    %7 = vector.broadcast %cst_6 : f32 to vector<24x648xf32>
    %8 = arith.maximumf %6, %7 : vector<24x648xf32>
    %c0_7 = arith.constant 0 : index
    %c0_8 = arith.constant 0 : index
    %9 = vector.load %arg8[%c0_7, %c0_8] : memref<1x648xf32, #tpu.memory_space<vmem>>, vector<1x648xf32>
    %10 = vector.broadcast %9 : vector<1x648xf32> to vector<24x648xf32>
    %11 = arith.mulf %8, %10 : vector<24x648xf32>
    %c0_9 = arith.constant 0 : index
    %c0_10 = arith.constant 0 : index
    %12 = vector.load %arg4[%c0_9, %c0_10] : memref<24x9xf32, #tpu.memory_space<vmem>>, vector<24x9xf32>
    %13 = vector.extract_strided_slice %12 {offsets = [0, 4], sizes = [24, 1], strides = [1, 1]} : vector<24x9xf32> to vector<24x1xf32>
    %14 = vector.broadcast %13 : vector<24x1xf32> to vector<24x648xf32>
    %15 = arith.mulf %11, %14 : vector<24x648xf32>
    %c19_i32 = arith.constant 19 : i32
    %16 = tpu.dynamic_rotate %11 by %c19_i32 dim 1 : vector<24x648xf32>, i32 -> vector<24x648xf32>
    %17 = vector.extract_strided_slice %12 {offsets = [0, 0], sizes = [24, 1], strides = [1, 1]} : vector<24x9xf32> to vector<24x1xf32>
    %18 = vector.broadcast %17 : vector<24x1xf32> to vector<24x648xf32>
    %19 = arith.mulf %16, %18 : vector<24x648xf32>
    %20 = arith.addf %15, %19 : vector<24x648xf32>
    %c18_i32 = arith.constant 18 : i32
    %21 = tpu.dynamic_rotate %11 by %c18_i32 dim 1 : vector<24x648xf32>, i32 -> vector<24x648xf32>
    %22 = vector.extract_strided_slice %12 {offsets = [0, 1], sizes = [24, 1], strides = [1, 1]} : vector<24x9xf32> to vector<24x1xf32>
    %23 = vector.broadcast %22 : vector<24x1xf32> to vector<24x648xf32>
    %24 = arith.mulf %21, %23 : vector<24x648xf32>
    %25 = arith.addf %20, %24 : vector<24x648xf32>
    %c17_i32 = arith.constant 17 : i32
    %26 = tpu.dynamic_rotate %11 by %c17_i32 dim 1 : vector<24x648xf32>, i32 -> vector<24x648xf32>
    %27 = vector.extract_strided_slice %12 {offsets = [0, 2], sizes = [24, 1], strides = [1, 1]} : vector<24x9xf32> to vector<24x1xf32>
    %28 = vector.broadcast %27 : vector<24x1xf32> to vector<24x648xf32>
    %29 = arith.mulf %26, %28 : vector<24x648xf32>
    %30 = arith.addf %25, %29 : vector<24x648xf32>
    %c1_i32 = arith.constant 1 : i32
    %31 = tpu.dynamic_rotate %11 by %c1_i32 dim 1 : vector<24x648xf32>, i32 -> vector<24x648xf32>
    %32 = vector.extract_strided_slice %12 {offsets = [0, 3], sizes = [24, 1], strides = [1, 1]} : vector<24x9xf32> to vector<24x1xf32>
    %33 = vector.broadcast %32 : vector<24x1xf32> to vector<24x648xf32>
    %34 = arith.mulf %31, %33 : vector<24x648xf32>
    %35 = arith.addf %30, %34 : vector<24x648xf32>
    %c647_i32 = arith.constant 647 : i32
    %36 = tpu.dynamic_rotate %11 by %c647_i32 dim 1 : vector<24x648xf32>, i32 -> vector<24x648xf32>
    %37 = vector.extract_strided_slice %12 {offsets = [0, 5], sizes = [24, 1], strides = [1, 1]} : vector<24x9xf32> to vector<24x1xf32>
    %38 = vector.broadcast %37 : vector<24x1xf32> to vector<24x648xf32>
    %39 = arith.mulf %36, %38 : vector<24x648xf32>
    %40 = arith.addf %35, %39 : vector<24x648xf32>
    %c631_i32 = arith.constant 631 : i32
    %41 = tpu.dynamic_rotate %11 by %c631_i32 dim 1 : vector<24x648xf32>, i32 -> vector<24x648xf32>
    %42 = vector.extract_strided_slice %12 {offsets = [0, 6], sizes = [24, 1], strides = [1, 1]} : vector<24x9xf32> to vector<24x1xf32>
    %43 = vector.broadcast %42 : vector<24x1xf32> to vector<24x648xf32>
    %44 = arith.mulf %41, %43 : vector<24x648xf32>
    %45 = arith.addf %40, %44 : vector<24x648xf32>
    %c630_i32 = arith.constant 630 : i32
    %46 = tpu.dynamic_rotate %11 by %c630_i32 dim 1 : vector<24x648xf32>, i32 -> vector<24x648xf32>
    %47 = vector.extract_strided_slice %12 {offsets = [0, 7], sizes = [24, 1], strides = [1, 1]} : vector<24x9xf32> to vector<24x1xf32>
    %48 = vector.broadcast %47 : vector<24x1xf32> to vector<24x648xf32>
    %49 = arith.mulf %46, %48 : vector<24x648xf32>
    %50 = arith.addf %45, %49 : vector<24x648xf32>
    %c629_i32 = arith.constant 629 : i32
    %51 = tpu.dynamic_rotate %11 by %c629_i32 dim 1 : vector<24x648xf32>, i32 -> vector<24x648xf32>
    %52 = vector.extract_strided_slice %12 {offsets = [0, 8], sizes = [24, 1], strides = [1, 1]} : vector<24x9xf32> to vector<24x1xf32>
    %53 = vector.broadcast %52 : vector<24x1xf32> to vector<24x648xf32>
    %54 = arith.mulf %51, %53 : vector<24x648xf32>
    %55 = arith.addf %50, %54 : vector<24x648xf32>
    %c0_11 = arith.constant 0 : index
    %c0_12 = arith.constant 0 : index
    %56 = vector.load %arg5[%c0_11, %c0_12] : memref<24x1xf32, #tpu.memory_space<vmem>>, vector<24x1xf32>
    %57 = vector.broadcast %56 : vector<24x1xf32> to vector<24x648xf32>
    %58 = arith.addf %55, %57 : vector<24x648xf32>
    %cst_13 = arith.constant 0.000000e+00 : f32
    %59 = vector.broadcast %cst_13 : f32 to vector<24x648xf32>
    %60 = arith.maximumf %58, %59 : vector<24x648xf32>
    %c0_14 = arith.constant 0 : index
    %c0_15 = arith.constant 0 : index
    %61 = vector.load %arg6[%c0_14, %c0_15] : memref<4x24xbf16, #tpu.memory_space<vmem>>, vector<4x24xbf16>
    %62 = arith.truncf %60 : vector<24x648xf32> to vector<24x648xbf16>
    %cst_16 = arith.constant dense<0.000000e+00> : vector<4x648xf32>
    %63 = tpu.matmul %61, %62, %cst_16 {dimension_numbers = #tpu.dot_dimension_numbers<[1], [0], [0], [1], [0, 0, 1, 1], [], []>} : vector<4x24xbf16>, vector<24x648xbf16>, vector<4x648xf32> -> vector<4x648xf32>
    %c0_17 = arith.constant 0 : index
    %c0_18 = arith.constant 0 : index
    %64 = vector.load %arg7[%c0_17, %c0_18] : memref<4x1xf32, #tpu.memory_space<vmem>>, vector<4x1xf32>
    %65 = vector.broadcast %64 : vector<4x1xf32> to vector<4x648xf32>
    %66 = arith.addf %63, %65 : vector<4x648xf32>
    %67 = arith.extf %1 : vector<4x648xbf16> to vector<4x648xf32>
    %68 = arith.addf %66, %67 : vector<4x648xf32>
    %c0_19 = arith.constant 0 : index
    %c0_20 = arith.constant 0 : index
    %c0_21 = arith.constant 0 : index
    %69 = vector.load %arg9[%c0_19, %c0_20, %c0_21] : memref<1x4x648xf32, #tpu.memory_space<vmem>>, vector<1x4x648xf32>
    %70 = vector.shape_cast %69 : vector<1x4x648xf32> to vector<4x648xf32>
    %71 = vector.shape_cast %68 : vector<4x648xf32> to vector<1x4x648xf32>
    tpu.vector_store %arg9[%c0_19, %c0_20, %c0_21], %71 {strides = array<i32>} : memref<1x4x648xf32, #tpu.memory_space<vmem>>, vector<1x4x648xf32>,
    return
  }
  func.func @transform_0(%arg0: i32) -> (i32, i32, i32) {
    %c0_i32 = arith.constant 0 : i32
    %c0_i32_0 = arith.constant 0 : i32
    %c0_i32_1 = arith.constant 0 : i32
    return %arg0, %c0_i32, %c0_i32_0 : i32, i32, i32
  }
  func.func @transform_1(%arg0: i32) -> (i32, i32) {
    %c0_i32 = arith.constant 0 : i32
    %c0_i32_0 = arith.constant 0 : i32
    %c0_i32_1 = arith.constant 0 : i32
    return %c0_i32, %c0_i32_0 : i32, i32
  }
  func.func @transform_2(%arg0: i32) -> (i32, i32) {
    %c0_i32 = arith.constant 0 : i32
    %c0_i32_0 = arith.constant 0 : i32
    %c0_i32_1 = arith.constant 0 : i32
    return %c0_i32, %c0_i32_0 : i32, i32
  }
  func.func @transform_3(%arg0: i32) -> (i32, i32) {
    %c0_i32 = arith.constant 0 : i32
    %c0_i32_0 = arith.constant 0 : i32
    %c0_i32_1 = arith.constant 0 : i32
    return %c0_i32, %c0_i32_0 : i32, i32
  }
  func.func @transform_4(%arg0: i32) -> (i32, i32) {
    %c0_i32 = arith.constant 0 : i32
    %c0_i32_0 = arith.constant 0 : i32
    %c0_i32_1 = arith.constant 0 : i32
    return %c0_i32, %c0_i32_0 : i32, i32
  }
  func.func @transform_5(%arg0: i32) -> (i32, i32) {
    %c0_i32 = arith.constant 0 : i32
    %c0_i32_0 = arith.constant 0 : i32
    %c0_i32_1 = arith.constant 0 : i32
    return %c0_i32, %c0_i32_0 : i32, i32
  }
  func.func @transform_6(%arg0: i32) -> (i32, i32) {
    %c0_i32 = arith.constant 0 : i32
    %c0_i32_0 = arith.constant 0 : i32
    %c0_i32_1 = arith.constant 0 : i32
    return %c0_i32, %c0_i32_0 : i32, i32
  }
  func.func @transform_7(%arg0: i32) -> (i32, i32) {
    %c0_i32 = arith.constant 0 : i32
    %c0_i32_0 = arith.constant 0 : i32
    %c0_i32_1 = arith.constant 0 : i32
    return %c0_i32, %c0_i32_0 : i32, i32
  }
  func.func @transform_8(%arg0: i32) -> (i32, i32, i32) {
    %c0_i32 = arith.constant 0 : i32
    %c0_i32_0 = arith.constant 0 : i32
    %c0_i32_1 = arith.constant 0 : i32
    return %arg0, %c0_i32, %c0_i32_0 : i32, i32, i32
  }
}

</mosaic_0001>

<llo_original>
// kernel: tpu_custom_call.1
$region0: #{tpu_custom_call.1}
  #allocation0 [shape = 'u32[]', space=smem, size = 0x4, offset = 0x4, fixed_abs, tag = 'smem constant byte address 0x4 - core index']
  #allocation1 [shape = 'u32[144,128]{1,0:T(1,128)}', space=vmem, size = 0x12000, scoped, tag = 'internal scratch']
  %s0 = inlined_call_operand.vmem [shape: bf16[1,4,648], index: 0, kind: input, shape index: {}]
  %s1 = inlined_call_operand.vmem [shape: bf16[24,4], index: 1, kind: input, shape index: {}]
  %s2 = inlined_call_operand.vmem [shape: f32[24,1], index: 2, kind: input, shape index: {}]
  %s3 = inlined_call_operand.vmem [shape: f32[24,9], index: 3, kind: input, shape index: {}]
  %s4 = inlined_call_operand.vmem [shape: f32[24,1], index: 4, kind: input, shape index: {}]
  %s5 = inlined_call_operand.vmem [shape: bf16[4,24], index: 5, kind: input, shape index: {}]
  %s6 = inlined_call_operand.vmem [shape: f32[4,1], index: 6, kind: input, shape index: {}]
  %s7 = inlined_call_operand.vmem [shape: f32[1,648], index: 7, kind: input, shape index: {}]
  %s8 = inlined_call_operand.hbm [shape: f32[1,4,648], index: 8, kind: output, shape index: {}]
  %s9 = sld [smem:[#allocation0]]
  $region42: #{tpu_custom_call.1} parent=0
    _
  %s11 = ssub.s32 1, %s9
  %s12 = scalar_select 0, %s11, %s9
  $region1: #{tpu_custom_call.1} parent=0
    #allocation2 [shape = 'u8[12288]{0}', space=vmem, size = 0x3000, scoped, tag = 'output window, operand 0, single buffered']
    #allocation3 [shape = 's32[1]{0}', space=sflag, size = 0x4, scoped, tag = 'scoped memory for tpu_custom_call.1']
    %13 = vsyncpa [#allocation3], 0
    // Predicated region
    $region2: #{tpu_custom_call.1} parent=1 // pred_check
      _
    $region3: #{tpu_custom_call.1} parent=1 // pred_check_branch
      %15 = sbr.rel (0) target = $region5
    $region4: #{tpu_custom_call.1} parent=1 // pred_region
      _
    $region5: #{tpu_custom_call.1} parent=1 // pred_fallthru
      _
    // Predicated region
    $region6: #{tpu_custom_call.1} parent=1 // pred_check
      _
    $region7: #{tpu_custom_call.1} parent=1 // pred_check_branch
      %17 = sbr.rel (0) target = $region9
    $region8: #{tpu_custom_call.1} parent=1 // pred_region
      _
    $region9: #{tpu_custom_call.1} parent=1 // pred_fallthru
      _
    // Predicated region
    $region10: #{tpu_custom_call.1} parent=1 // pred_check
      _
    $region11: #{tpu_custom_call.1} parent=1 // pred_check_branch
      %19 = sbr.rel (0) target = $region13
    $region12: #{tpu_custom_call.1} parent=1 // pred_region
      _
    $region13: #{tpu_custom_call.1} parent=1 // pred_fallthru
      _
    // Predicated region
    $region14: #{tpu_custom_call.1} parent=1 // pred_check
      _
    $region15: #{tpu_custom_call.1} parent=1 // pred_check_branch
      %21 = sbr.rel (0) target = $region17
    $region16: #{tpu_custom_call.1} parent=1 // pred_region
      _
    $region17: #{tpu_custom_call.1} parent=1 // pred_fallthru
      _
    // Predicated region
    $region18: #{tpu_custom_call.1} parent=1 // pred_check
      _
    $region19: #{tpu_custom_call.1} parent=1 // pred_check_branch
      %23 = sbr.rel (0) target = $region21
    $region20: #{tpu_custom_call.1} parent=1 // pred_region
      _
    $region21: #{tpu_custom_call.1} parent=1 // pred_fallthru
      _
    // Predicated region
    $region22: #{tpu_custom_call.1} parent=1 // pred_check
      _
    $region23: #{tpu_custom_call.1} parent=1 // pred_check_branch
      %25 = sbr.rel (0) target = $region25
    $region24: #{tpu_custom_call.1} parent=1 // pred_region
      _
    $region25: #{tpu_custom_call.1} parent=1 // pred_fallthru
      _
    // Predicated region
    $region26: #{tpu_custom_call.1} parent=1 // pred_check
      _
    $region27: #{tpu_custom_call.1} parent=1 // pred_check_branch
      %27 = sbr.rel (0) target = $region29
    $region28: #{tpu_custom_call.1} parent=1 // pred_region
      _
    $region29: #{tpu_custom_call.1} parent=1 // pred_fallthru
      _
    // Predicated region
    $region30: #{tpu_custom_call.1} parent=1 // pred_check
      _
    $region31: #{tpu_custom_call.1} parent=1 // pred_check_branch
      %29 = sbr.rel (0) target = $region33
    $region32: #{tpu_custom_call.1} parent=1 // pred_region
      _
    $region33: #{tpu_custom_call.1} parent=1 // pred_fallthru
      _
    %v31 = vld [vmem:[%s0] sm:$0xff]
    %v32 = vld [vmem:[%s0 + $0x8] sm:$0xf]
    %v33 = vld [vmem:[%s1] sm:$0xf]
    %v34 = vld [vmem:[%s1 + $0x4] sm:$0xf]
    %v35 = vld [vmem:[%s1 + $0x8] sm:$0xf]
    %v36 = vld [vmem:[%s2] sm:$0xff]
    %v37 = vld [vmem:[%s2 + $0x8] sm:$0xff]
    %v38 = vld [vmem:[%s2 + $0x10] sm:$0xff]
    %40 = vset.pattern.permute.xlu0 0
    %41 = vperm.xlu0 %40, %v36
    %v42 = vpop.permute.xlu0 %41
    %45 = vset.pattern.permute.xlu0 0
    %46 = vperm.xlu0 %45, %v37
    %v47 = vpop.permute.xlu0 %46
    %50 = vset.pattern.permute.xlu0 0
    %51 = vperm.xlu0 %50, %v38
    %v52 = vpop.permute.xlu0 %51
    %v57 = vunpack.c.l.b16 %v33
    %v58 = vunpack.c.l.b16 %v34
    %v59 = vunpack.c.l.b16 %v35
    %v60 = vpack.c.b16 %v58, %v57
    %v61 = vpack.c.b16 %v59, %v59
    %v64 = vcombine.high %v31, %v31
    %v66 = vunpack.c.l.s4 1983009808
    %v67 = vunpack.c.0.s8 %v66
    %v68 = vlaneseq
    %v69 = vshrl.u32 %v68, 7
    %v70 = vsub.s32 %v67, %v69
    %v71 = vrot.slane %v31, %v70
    %v73 = vunpack.c.l.s4 1983009808
    %v74 = vunpack.c.0.s8 %v73
    %v75 = vlaneseq
    %v76 = vshrl.u32 %v75, 7
    %v77 = vsub.s32 %v74, %v76
    %v78 = vrot.slane %v64, %v77
    %v79 = vcombine.high %v71, %v71
    %v80 = vcombine.high %v78, %v78
    %v82 = vunpack.c.l.s4 1983009808
    %v83 = vunpack.c.0.s8 %v82
    %v84 = vlaneseq
    %v85 = vshrl.u32 %v84, 7
    %v86 = vsub.s32 %v83, %v85
    %v87 = vrot.slane %v32, %v86
    %v88 = vcombine.high %v87, %v87
    %vm89 = vcmask 31744
    %v91 = vsel %vm89, %v60, 0
    %v94 = vsel %vm89, %v61, 0
    %vm96 = vcmask 1041408
    %v98 = vsel %vm96, %v71, 0
    %v101 = vsel %vm96, %v79, 0
    %v104 = vsel %vm96, %v78, 0
    %v107 = vsel %vm96, %v80, 0
    %v110 = vsel %vm96, %v87, 0
    %v113 = vsel %vm96, %v88, 0
    %115 = vmatprep.subr.bf16.mxu0 0
    %116 = vmatpush1.bf16.msra.mxu0 0
    %117 = vmatprep.subr.bf16.mxu0 0
    %118 = vmatpush1.bf16.msra.mxu0 0
    %119 = vmatprep.subr.bf16.mxu0 0
    %120 = vmatpush1.bf16.msra.mxu0 0
    %121 = vmatprep.subr.bf16.mxu0 0
    %122 = vmatpush1.bf16.msra.mxu0 0
    %123 = vmatprep.subr.bf16.mxu0 0
    %124 = vmatpush1.bf16.msra.mxu0 0
    %125 = vmatprep.subr.bf16.mxu0 0
    %126 = vmatpush1.bf16.msra.mxu0 0
    %127 = vmatprep.subr.bf16.mxu0 0
    %128 = vmatpush1.bf16.msra.mxu0 0
    %129 = vmatprep.subr.bf16.mxu0 %v101
    %130 = vmatpush1.bf16.msra.mxu0 %v98
    %131 = vmatprep.subr.bf16.mxu0 0
    %132 = vmatpush2.bf16.msra.mxu0 0
    %133 = vmatprep.subr.bf16.mxu0 0
    %134 = vmatpush2.bf16.msra.mxu0 0
    %135 = vmatprep.subr.bf16.mxu0 0
    %136 = vmatpush2.bf16.msra.mxu0 0
    %137 = vmatprep.subr.bf16.mxu0 0
    %138 = vmatpush2.bf16.msra.mxu0 0
    %139 = vmatprep.subr.bf16.mxu0 0
    %140 = vmatpush2.bf16.msra.mxu0 0
    %141 = vmatprep.subr.bf16.mxu0 0
    %142 = vmatpush2.bf16.msra.mxu0 0
    %143 = vmatprep.subr.bf16.mxu0 0
    %144 = vmatpush2.bf16.msra.mxu0 0
    %145 = vmatprep.subr.bf16.mxu0 0
    %146 = vmatpush2.bf16.msra.mxu0 0
    %147 = vmatprep.mubr.bf16.mxu0 0
    %148 = vmatmul.mubr.bf16.gmra.mxu0 %v91
    %v149 = vpop.f32.mrf.mxu0
    %v150 = vadd.f32 %v42, %v149
    %v151 = vpop.f32.mrf.mxu0
    %v152 = vadd.f32 %v42, %v151
    %v153 = vpop.f32.mrf.mxu0
    %v154 = vadd.f32 %v47, %v153
    %v155 = vpop.f32.mrf.mxu0
    %v156 = vadd.f32 %v47, %v155
    %157 = vmatprep.mubr.bf16.mxu0 0
    %158 = vmatmul.mubr.bf16.gmra.mxu0 %v94
    %v159 = vpop.f32.mrf.mxu0
    %v160 = vadd.f32 %v52, %v159
    %v161 = vpop.f32.mrf.mxu0
    %v162 = vadd.f32 %v52, %v161
    %v163 = vpop.f32.mrf.mxu0
    %v164 = vpop.f32.mrf.mxu0
    %165 = vdwg.mxu0
    %166 = vmatprep.subr.bf16.mxu0 0
    %167 = vmatpush1.bf16.msra.mxu0 0
    %168 = vmatprep.subr.bf16.mxu0 0
    %169 = vmatpush1.bf16.msra.mxu0 0
    %170 = vmatprep.subr.bf16.mxu0 0
    %171 = vmatpush1.bf16.msra.mxu0 0
    %172 = vmatprep.subr.bf16.mxu0 0
    %173 = vmatpush1.bf16.msra.mxu0 0
    %174 = vmatprep.subr.bf16.mxu0 0
    %175 = vmatpush1.bf16.msra.mxu0 0
    %176 = vmatprep.subr.bf16.mxu0 0
    %177 = vmatpush1.bf16.msra.mxu0 0
    %178 = vmatprep.subr.bf16.mxu0 0
    %179 = vmatpush1.bf16.msra.mxu0 0
    %180 = vmatprep.subr.bf16.mxu0 %v107
    %181 = vmatpush1.bf16.msra.mxu0 %v104
    %182 = vmatprep.subr.bf16.mxu0 0
    %183 = vmatpush2.bf16.msra.mxu0 0
    %184 = vmatprep.subr.bf16.mxu0 0
    %185 = vmatpush2.bf16.msra.mxu0 0
    %186 = vmatprep.subr.bf16.mxu0 0
    %187 = vmatpush2.bf16.msra.mxu0 0
    %188 = vmatprep.subr.bf16.mxu0 0
    %189 = vmatpush2.bf16.msra.mxu0 0
    %190 = vmatprep.subr.bf16.mxu0 0
    %191 = vmatpush2.bf16.msra.mxu0 0
    %192 = vmatprep.subr.bf16.mxu0 0
    %193 = vmatpush2.bf16.msra.mxu0 0
    %194 = vmatprep.subr.bf16.mxu0 0
    %195 = vmatpush2.bf16.msra.mxu0 0
    %196 = vmatprep.subr.bf16.mxu0 0
    %197 = vmatpush2.bf16.msra.mxu0 0
    %198 = vmatprep.mubr.bf16.mxu0 0
    %199 = vmatmul.mubr.bf16.gmra.mxu0 %v91
    %v200 = vpop.f32.mrf.mxu0
    %v201 = vadd.f32 %v42, %v200
    %v202 = vpop.f32.mrf.mxu0
    %v203 = vadd.f32 %v42, %v202
    %v204 = vpop.f32.mrf.mxu0
    %v205 = vadd.f32 %v47, %v204
    %v206 = vpop.f32.mrf.mxu0
    %v207 = vadd.f32 %v47, %v206
    %208 = vmatprep.mubr.bf16.mxu0 0
    %209 = vmatmul.mubr.bf16.gmra.mxu0 %v94
    %v210 = vpop.f32.mrf.mxu0
    %v211 = vadd.f32 %v52, %v210
    %v212 = vpop.f32.mrf.mxu0
    %v213 = vadd.f32 %v52, %v212
    %v214 = vpop.f32.mrf.mxu0
    %v215 = vpop.f32.mrf.mxu0
    %216 = vdwg.mxu0
    %217 = vmatprep.subr.bf16.mxu0 0
    %218 = vmatpush1.bf16.msra.mxu0 0
    %219 = vmatprep.subr.bf16.mxu0 0
    %220 = vmatpush1.bf16.msra.mxu0 0
    %221 = vmatprep.subr.bf16.mxu0 0
    %222 = vmatpush1.bf16.msra.mxu0 0
    %223 = vmatprep.subr.bf16.mxu0 0
    %224 = vmatpush1.bf16.msra.mxu0 0
    %225 = vmatprep.subr.bf16.mxu0 0
    %226 = vmatpush1.bf16.msra.mxu0 0
    %227 = vmatprep.subr.bf16.mxu0 0
    %228 = vmatpush1.bf16.msra.mxu0 0
    %229 = vmatprep.subr.bf16.mxu0 0
    %230 = vmatpush1.bf16.msra.mxu0 0
    %231 = vmatprep.subr.bf16.mxu0 %v113
    %232 = vmatpush1.bf16.msra.mxu0 %v110
    %233 = vmatprep.subr.bf16.mxu0 0
    %234 = vmatpush2.bf16.msra.mxu0 0
    %235 = vmatprep.subr.bf16.mxu0 0
    %236 = vmatpush2.bf16.msra.mxu0 0
    %237 = vmatprep.subr.bf16.mxu0 0
    %238 = vmatpush2.bf16.msra.mxu0 0
    %239 = vmatprep.subr.bf16.mxu0 0
    %240 = vmatpush2.bf16.msra.mxu0 0
    %241 = vmatprep.subr.bf16.mxu0 0
    %242 = vmatpush2.bf16.msra.mxu0 0
    %243 = vmatprep.subr.bf16.mxu0 0
    %244 = vmatpush2.bf16.msra.mxu0 0
    %245 = vmatprep.subr.bf16.mxu0 0
    %246 = vmatpush2.bf16.msra.mxu0 0
    %247 = vmatprep.subr.bf16.mxu0 0
    %248 = vmatpush2.bf16.msra.mxu0 0
    %249 = vmatprep.mubr.bf16.mxu0 0
    %250 = vmatmul.mubr.bf16.gmra.mxu0 %v91
    %v251 = vpop.f32.mrf.mxu0
    %v252 = vadd.f32 %v42, %v251
    %v253 = vpop.f32.mrf.mxu0
    %v254 = vadd.f32 %v42, %v253
    %v255 = vpop.f32.mrf.mxu0
    %v256 = vadd.f32 %v47, %v255
    %v257 = vpop.f32.mrf.mxu0
    %v258 = vadd.f32 %v47, %v257
    %259 = vmatprep.mubr.bf16.mxu0 0
    %260 = vmatmul.mubr.bf16.gmra.mxu0 %v94
    %v261 = vpop.f32.mrf.mxu0
    %v262 = vadd.f32 %v52, %v261
    %v263 = vpop.f32.mrf.mxu0
    %v264 = vadd.f32 %v52, %v263
    %v265 = vpop.f32.mrf.mxu0
    %v266 = vpop.f32.mrf.mxu0
    %267 = vdwg.mxu0
    %v268 = vmax.f32 %v150, 0.0
    %v269 = vmax.f32 %v152, 0.0
    %v270 = vmax.f32 %v201, 0.0
    %v271 = vmax.f32 %v203, 0.0
    %v272 = vmax.f32 %v252, 0.0
    %v273 = vmax.f32 %v254, 0.0
    %v274 = vmax.f32 %v154, 0.0
    %v275 = vmax.f32 %v156, 0.0
    %v276 = vmax.f32 %v205, 0.0
    %v277 = vmax.f32 %v207, 0.0
    %v278 = vmax.f32 %v256, 0.0
    %v279 = vmax.f32 %v258, 0.0
    %v280 = vmax.f32 %v160, 0.0
    %v281 = vmax.f32 %v162, 0.0
    %v282 = vmax.f32 %v211, 0.0
    %v283 = vmax.f32 %v213, 0.0
    %v284 = vmax.f32 %v262, 0.0
    %v285 = vmax.f32 %v264, 0.0
    %v286 = vld [vmem:[%s7] sm:$0x3f]
    %v288 = vlaneseq
    %v289 = vshrl.u32 %v288, 7
    %v290 = vsub.s32 0, %v289
    %v291 = vrot.slane %v286, %v290
    %v292 = vlaneseq
    %v293 = vshrl.u32 %v292, 7
    %v294 = vsub.s32 1, %v293
    %v295 = vrot.slane %v286, %v294
    %v296 = vlaneseq
    %v297 = vshrl.u32 %v296, 7
    %v298 = vsub.s32 2, %v297
    %v299 = vrot.slane %v286, %v298
    %v300 = vlaneseq
    %v301 = vshrl.u32 %v300, 7
    %v302 = vsub.s32 3, %v301
    %v303 = vrot.slane %v286, %v302
    %v304 = vlaneseq
    %v305 = vshrl.u32 %v304, 7
    %v306 = vsub.s32 4, %v305
    %v307 = vrot.slane %v286, %v306
    %v308 = vlaneseq
    %v309 = vshrl.u32 %v308, 7
    %v310 = vsub.s32 5, %v309
    %v311 = vrot.slane %v286, %v310
    %v318 = vmul.f32 %v268, %v291
    %v319 = vmul.f32 %v269, %v295
    %v320 = vmul.f32 %v270, %v299
    %v321 = vmul.f32 %v271, %v303
    %v322 = vmul.f32 %v272, %v307
    %v323 = vmul.f32 %v273, %v311
    %v324 = vmul.f32 %v274, %v291
    %v325 = vmul.f32 %v275, %v295
    %v326 = vmul.f32 %v276, %v299
    %v327 = vmul.f32 %v277, %v303
    %v328 = vmul.f32 %v278, %v307
    %v329 = vmul.f32 %v279, %v311
    %v330 = vmul.f32 %v280, %v291
    %v331 = vmul.f32 %v281, %v295
    %v332 = vmul.f32 %v282, %v299
    %v333 = vmul.f32 %v283, %v303
    %v334 = vmul.f32 %v284, %v307
    %v335 = vmul.f32 %v285, %v311
    %v336 = vld [vmem:[%s3] sm:$0xff]
    %v337 = vld [vmem:[%s3 + $0x8] sm:$0xff]
    %v338 = vld [vmem:[%s3 + $0x10] sm:$0xff]
    %340 = vset.pattern.permute.xlu0 4
    %341 = vperm.xlu0 %340, %v336
    %v342 = vpop.permute.xlu0 %341
    %345 = vset.pattern.permute.xlu0 4
    %346 = vperm.xlu0 %345, %v337
    %v347 = vpop.permute.xlu0 %346
    %350 = vset.pattern.permute.xlu0 4
    %351 = vperm.xlu0 %350, %v338
    %v352 = vpop.permute.xlu0 %351
    %v354 = vmul.f32 %v318, %v342
    %v355 = vmul.f32 %v319, %v342
    %v356 = vmul.f32 %v320, %v342
    %v357 = vmul.f32 %v321, %v342
    %v358 = vmul.f32 %v322, %v342
    %v359 = vmul.f32 %v323, %v342
    %v360 = vmul.f32 %v324, %v347
    %v361 = vmul.f32 %v325, %v347
    %v362 = vmul.f32 %v326, %v347
    %v363 = vmul.f32 %v327, %v347
    %v364 = vmul.f32 %v328, %v347
    %v365 = vmul.f32 %v329, %v347
    %v366 = vmul.f32 %v330, %v352
    %v367 = vmul.f32 %v331, %v352
    %v368 = vmul.f32 %v332, %v352
    %v369 = vmul.f32 %v333, %v352
    %v370 = vmul.f32 %v334, %v352
    %v371 = vmul.f32 %v335, %v352
    %vm372 = vcmask 1047616
    %373 = vrot.lane.b32.xlu0 %v318, 8
    %v374 = vpop.permute.xlu0 %373
    %375 = vrot.lane.b32.xlu0 %v324, 8
    %v376 = vpop.permute.xlu0 %375
    %377 = vrot.lane.b32.xlu0 %v330, 8
    %v378 = vpop.permute.xlu0 %377
    %379 = vrot.lane.b32.xlu0 %v319, 8
    %v380 = vpop.permute.xlu0 %379
    %381 = vrot.lane.b32.xlu0 %v325, 8
    %v382 = vpop.permute.xlu0 %381
    %383 = vrot.lane.b32.xlu0 %v331, 8
    %v384 = vpop.permute.xlu0 %383
    %385 = vrot.lane.b32.xlu0 %v320, 8
    %v386 = vpop.permute.xlu0 %385
    %387 = vrot.lane.b32.xlu0 %v326, 8
    %v388 = vpop.permute.xlu0 %387
    %389 = vrot.lane.b32.xlu0 %v332, 8
    %v390 = vpop.permute.xlu0 %389
    %391 = vrot.lane.b32.xlu0 %v321, 8
    %v392 = vpop.permute.xlu0 %391
    %393 = vrot.lane.b32.xlu0 %v327, 8
    %v394 = vpop.permute.xlu0 %393
    %395 = vrot.lane.b32.xlu0 %v333, 8
    %v396 = vpop.permute.xlu0 %395
    %397 = vrot.lane.b32.xlu0 %v322, 8
    %v398 = vpop.permute.xlu0 %397
    %399 = vrot.lane.b32.xlu0 %v328, 8
    %v400 = vpop.permute.xlu0 %399
    %401 = vrot.lane.b32.xlu0 %v334, 8
    %v402 = vpop.permute.xlu0 %401
    %v403 = vsel %vm372, %v374, %v323
    %v404 = vsel %vm372, %v376, %v329
    %v405 = vsel %vm372, %v378, %v335
    %v406 = vsel %vm372, %v380, %v374
    %v407 = vsel %vm372, %v382, %v376
    %v408 = vsel %vm372, %v384, %v378
    %v409 = vsel %vm372, %v386, %v380
    %v410 = vsel %vm372, %v388, %v382
    %v411 = vsel %vm372, %v390, %v384
    %v412 = vsel %vm372, %v392, %v386
    %v413 = vsel %vm372, %v394, %v388
    %v414 = vsel %vm372, %v396, %v390
    %v415 = vsel %vm372, %v398, %v392
    %v416 = vsel %vm372, %v400, %v394
    %v417 = vsel %vm372, %v402, %v396
    %418 = vset.pattern.permute.xlu0 0
    %419 = vperm.xlu0 %418, %v336
    %v420 = vpop.permute.xlu0 %419
    %422 = vset.pattern.permute.xlu0 0
    %423 = vperm.xlu0 %422, %v337
    %v424 = vpop.permute.xlu0 %423
    %426 = vset.pattern.permute.xlu0 0
    %427 = vperm.xlu0 %426, %v338
    %v428 = vpop.permute.xlu0 %427
    %v430 = vmul.f32 %v322, %v420
    %v431 = vmul.f32 %v403, %v420
    %v432 = vmul.f32 %v406, %v420
    %v433 = vmul.f32 %v409, %v420
    %v434 = vmul.f32 %v412, %v420
    %v435 = vmul.f32 %v415, %v420
    %v436 = vmul.f32 %v328, %v424
    %v437 = vmul.f32 %v404, %v424
    %v438 = vmul.f32 %v407, %v424
    %v439 = vmul.f32 %v410, %v424
    %v440 = vmul.f32 %v413, %v424
    %v441 = vmul.f32 %v416, %v424
    %v442 = vmul.f32 %v334, %v428
    %v443 = vmul.f32 %v405, %v428
    %v444 = vmul.f32 %v408, %v428
    %v445 = vmul.f32 %v411, %v428
    %v446 = vmul.f32 %v414, %v428
    %v447 = vmul.f32 %v417, %v428
    %466 = vrot.lane.b32.xlu0 %v430, 11
    %v467 = vpop.permute.xlu0 %466
    %468 = vrot.lane.b32.xlu0 %v431, 11
    %v469 = vpop.permute.xlu0 %468
    %470 = vrot.lane.b32.xlu0 %v432, 11
    %v471 = vpop.permute.xlu0 %470
    %472 = vrot.lane.b32.xlu0 %v433, 11
    %v473 = vpop.permute.xlu0 %472
    %474 = vrot.lane.b32.xlu0 %v434, 11
    %v475 = vpop.permute.xlu0 %474
    %476 = vrot.lane.b32.xlu0 %v435, 11
    %v477 = vpop.permute.xlu0 %476
    %478 = vrot.lane.b32.xlu0 %v436, 11
    %v479 = vpop.permute.xlu0 %478
    %480 = vrot.lane.b32.xlu0 %v437, 11
    %v481 = vpop.permute.xlu0 %480
    %482 = vrot.lane.b32.xlu0 %v438, 11
    %v483 = vpop.permute.xlu0 %482
    %484 = vrot.lane.b32.xlu0 %v439, 11
    %v485 = vpop.permute.xlu0 %484
    %486 = vrot.lane.b32.xlu0 %v440, 11
    %v487 = vpop.permute.xlu0 %486
    %488 = vrot.lane.b32.xlu0 %v441, 11
    %v489 = vpop.permute.xlu0 %488
    %490 = vrot.lane.b32.xlu0 %v442, 11
    %v491 = vpop.permute.xlu0 %490
    %492 = vrot.lane.b32.xlu0 %v443, 11
    %v493 = vpop.permute.xlu0 %492
    %494 = vrot.lane.b32.xlu0 %v444, 11
    %v495 = vpop.permute.xlu0 %494
    %496 = vrot.lane.b32.xlu0 %v445, 11
    %v497 = vpop.permute.xlu0 %496
    %498 = vrot.lane.b32.xlu0 %v446, 11
    %v499 = vpop.permute.xlu0 %498
    %500 = vrot.lane.b32.xlu0 %v447, 11
    %v501 = vpop.permute.xlu0 %500
    %vm502 = vcmask 89088
    %v503 = vsel %vm502, %v467, %v469
    %v504 = vsel %vm502, %v469, %v471
    %v505 = vsel %vm502, %v471, %v473
    %v506 = vsel %vm502, %v473, %v475
    %v507 = vsel %vm502, %v475, %v477
    %v508 = vsel %vm502, %v479, %v481
    %v509 = vsel %vm502, %v481, %v483
    %v510 = vsel %vm502, %v483, %v485
    %v511 = vsel %vm502, %v485, %v487
    %v512 = vsel %vm502, %v487, %v489
    %v513 = vsel %vm502, %v491, %v493
    %v514 = vsel %vm502, %v493, %v495
    %v515 = vsel %vm502, %v495, %v497
    %v516 = vsel %vm502, %v497, %v499
    %v517 = vsel %vm502, %v499, %v501
    %v536 = vadd.f32 %v354, %v503
    %v537 = vadd.f32 %v355, %v504
    %v538 = vadd.f32 %v356, %v505
    %v539 = vadd.f32 %v357, %v506
    %v540 = vadd.f32 %v358, %v507
    %v541 = vadd.f32 %v359, %v477
    %v542 = vadd.f32 %v360, %v508
    %v543 = vadd.f32 %v361, %v509
    %v544 = vadd.f32 %v362, %v510
    %v545 = vadd.f32 %v363, %v511
    %v546 = vadd.f32 %v364, %v512
    %v547 = vadd.f32 %v365, %v489
    %v548 = vadd.f32 %v366, %v513
    %v549 = vadd.f32 %v367, %v514
    %v550 = vadd.f32 %v368, %v515
    %v551 = vadd.f32 %v369, %v516
    %v552 = vadd.f32 %v370, %v517
    %v553 = vadd.f32 %v371, %v501
    %554 = vset.pattern.permute.xlu0 1
    %555 = vperm.xlu0 %554, %v336
    %v556 = vpop.permute.xlu0 %555
    %558 = vset.pattern.permute.xlu0 1
    %559 = vperm.xlu0 %558, %v337
    %v560 = vpop.permute.xlu0 %559
    %562 = vset.pattern.permute.xlu0 1
    %563 = vperm.xlu0 %562, %v338
    %v564 = vpop.permute.xlu0 %563
    %v566 = vmul.f32 %v322, %v556
    %v567 = vmul.f32 %v403, %v556
    %v568 = vmul.f32 %v406, %v556
    %v569 = vmul.f32 %v409, %v556
    %v570 = vmul.f32 %v412, %v556
    %v571 = vmul.f32 %v415, %v556
    %v572 = vmul.f32 %v328, %v560
    %v573 = vmul.f32 %v404, %v560
    %v574 = vmul.f32 %v407, %v560
    %v575 = vmul.f32 %v410, %v560
    %v576 = vmul.f32 %v413, %v560
    %v577 = vmul.f32 %v416, %v560
    %v578 = vmul.f32 %v334, %v564
    %v579 = vmul.f32 %v405, %v564
    %v580 = vmul.f32 %v408, %v564
    %v581 = vmul.f32 %v411, %v564
    %v582 = vmul.f32 %v414, %v564
    %v583 = vmul.f32 %v417, %v564
    %602 = vrot.lane.b32.xlu0 %v566, 10
    %v603 = vpop.permute.xlu0 %602
    %604 = vrot.lane.b32.xlu0 %v567, 10
    %v605 = vpop.permute.xlu0 %604
    %606 = vrot.lane.b32.xlu0 %v568, 10
    %v607 = vpop.permute.xlu0 %606
    %608 = vrot.lane.b32.xlu0 %v569, 10
    %v609 = vpop.permute.xlu0 %608
    %610 = vrot.lane.b32.xlu0 %v570, 10
    %v611 = vpop.permute.xlu0 %610
    %612 = vrot.lane.b32.xlu0 %v571, 10
    %v613 = vpop.permute.xlu0 %612
    %614 = vrot.lane.b32.xlu0 %v572, 10
    %v615 = vpop.permute.xlu0 %614
    %616 = vrot.lane.b32.xlu0 %v573, 10
    %v617 = vpop.permute.xlu0 %616
    %618 = vrot.lane.b32.xlu0 %v574, 10
    %v619 = vpop.permute.xlu0 %618
    %620 = vrot.lane.b32.xlu0 %v575, 10
    %v621 = vpop.permute.xlu0 %620
    %622 = vrot.lane.b32.xlu0 %v576, 10
    %v623 = vpop.permute.xlu0 %622
    %624 = vrot.lane.b32.xlu0 %v577, 10
    %v625 = vpop.permute.xlu0 %624
    %626 = vrot.lane.b32.xlu0 %v578, 10
    %v627 = vpop.permute.xlu0 %626
    %628 = vrot.lane.b32.xlu0 %v579, 10
    %v629 = vpop.permute.xlu0 %628
    %630 = vrot.lane.b32.xlu0 %v580, 10
    %v631 = vpop.permute.xlu0 %630
    %632 = vrot.lane.b32.xlu0 %v581, 10
    %v633 = vpop.permute.xlu0 %632
    %634 = vrot.lane.b32.xlu0 %v582, 10
    %v635 = vpop.permute.xlu0 %634
    %636 = vrot.lane.b32.xlu0 %v583, 10
    %v637 = vpop.permute.xlu0 %636
    %vm638 = vcmask 80896
    %v639 = vsel %vm638, %v603, %v605
    %v640 = vsel %vm638, %v605, %v607
    %v641 = vsel %vm638, %v607, %v609
    %v642 = vsel %vm638, %v609, %v611
    %v643 = vsel %vm638, %v611, %v613
    %v644 = vsel %vm638, %v615, %v617
    %v645 = vsel %vm638, %v617, %v619
    %v646 = vsel %vm638, %v619, %v621
    %v647 = vsel %vm638, %v621, %v623
    %v648 = vsel %vm638, %v623, %v625
    %v649 = vsel %vm638, %v627, %v629
    %v650 = vsel %vm638, %v629, %v631
    %v651 = vsel %vm638, %v631, %v633
    %v652 = vsel %vm638, %v633, %v635
    %v653 = vsel %vm638, %v635, %v637
    %v672 = vadd.f32 %v536, %v639
    %v673 = vadd.f32 %v537, %v640
    %v674 = vadd.f32 %v538, %v641
    %v675 = vadd.f32 %v539, %v642
    %v676 = vadd.f32 %v540, %v643
    %v677 = vadd.f32 %v541, %v613
    %v678 = vadd.f32 %v542, %v644
    %v679 = vadd.f32 %v543, %v645
    %v680 = vadd.f32 %v544, %v646
    %v681 = vadd.f32 %v545, %v647
    %v682 = vadd.f32 %v546, %v648
    %v683 = vadd.f32 %v547, %v625
    %v684 = vadd.f32 %v548, %v649
    %v685 = vadd.f32 %v549, %v650
    %v686 = vadd.f32 %v550, %v651
    %v687 = vadd.f32 %v551, %v652
    %v688 = vadd.f32 %v552, %v653
    %v689 = vadd.f32 %v553, %v637
    %690 = vset.pattern.permute.xlu0 2
    %691 = vperm.xlu0 %690, %v336
    %v692 = vpop.permute.xlu0 %691
    %694 = vset.pattern.permute.xlu0 2
    %695 = vperm.xlu0 %694, %v337
    %v696 = vpop.permute.xlu0 %695
    %698 = vset.pattern.permute.xlu0 2
    %699 = vperm.xlu0 %698, %v338
    %v700 = vpop.permute.xlu0 %699
    %v702 = vmul.f32 %v322, %v692
    %v703 = vmul.f32 %v403, %v692
    %v704 = vmul.f32 %v406, %v692
    %v705 = vmul.f32 %v409, %v692
    %v706 = vmul.f32 %v412, %v692
    %v707 = vmul.f32 %v415, %v692
    %v708 = vmul.f32 %v328, %v696
    %v709 = vmul.f32 %v404, %v696
    %v710 = vmul.f32 %v407, %v696
    %v711 = vmul.f32 %v410, %v696
    %v712 = vmul.f32 %v413, %v696
    %v713 = vmul.f32 %v416, %v696
    %v714 = vmul.f32 %v334, %v700
    %v715 = vmul.f32 %v405, %v700
    %v716 = vmul.f32 %v408, %v700
    %v717 = vmul.f32 %v411, %v700
    %v718 = vmul.f32 %v414, %v700
    %v719 = vmul.f32 %v417, %v700
    %738 = vrot.lane.b32.xlu0 %v702, 9
    %v739 = vpop.permute.xlu0 %738
    %740 = vrot.lane.b32.xlu0 %v703, 9
    %v741 = vpop.permute.xlu0 %740
    %742 = vrot.lane.b32.xlu0 %v704, 9
    %v743 = vpop.permute.xlu0 %742
    %744 = vrot.lane.b32.xlu0 %v705, 9
    %v745 = vpop.permute.xlu0 %744
    %746 = vrot.lane.b32.xlu0 %v706, 9
    %v747 = vpop.permute.xlu0 %746
    %748 = vrot.lane.b32.xlu0 %v707, 9
    %v749 = vpop.permute.xlu0 %748
    %750 = vrot.lane.b32.xlu0 %v708, 9
    %v751 = vpop.permute.xlu0 %750
    %752 = vrot.lane.b32.xlu0 %v709, 9
    %v753 = vpop.permute.xlu0 %752
    %754 = vrot.lane.b32.xlu0 %v710, 9
    %v755 = vpop.permute.xlu0 %754
    %756 = vrot.lane.b32.xlu0 %v711, 9
    %v757 = vpop.permute.xlu0 %756
    %758 = vrot.lane.b32.xlu0 %v712, 9
    %v759 = vpop.permute.xlu0 %758
    %760 = vrot.lane.b32.xlu0 %v713, 9
    %v761 = vpop.permute.xlu0 %760
    %762 = vrot.lane.b32.xlu0 %v714, 9
    %v763 = vpop.permute.xlu0 %762
    %764 = vrot.lane.b32.xlu0 %v715, 9
    %v765 = vpop.permute.xlu0 %764
    %766 = vrot.lane.b32.xlu0 %v716, 9
    %v767 = vpop.permute.xlu0 %766
    %768 = vrot.lane.b32.xlu0 %v717, 9
    %v769 = vpop.permute.xlu0 %768
    %770 = vrot.lane.b32.xlu0 %v718, 9
    %v771 = vpop.permute.xlu0 %770
    %772 = vrot.lane.b32.xlu0 %v719, 9
    %v773 = vpop.permute.xlu0 %772
    %vm774 = vcmask 72704
    %v775 = vsel %vm774, %v739, %v741
    %v776 = vsel %vm774, %v741, %v743
    %v777 = vsel %vm774, %v743, %v745
    %v778 = vsel %vm774, %v745, %v747
    %v779 = vsel %vm774, %v747, %v749
    %v780 = vsel %vm774, %v751, %v753
    %v781 = vsel %vm774, %v753, %v755
    %v782 = vsel %vm774, %v755, %v757
    %v783 = vsel %vm774, %v757, %v759
    %v784 = vsel %vm774, %v759, %v761
    %v785 = vsel %vm774, %v763, %v765
    %v786 = vsel %vm774, %v765, %v767
    %v787 = vsel %vm774, %v767, %v769
    %v788 = vsel %vm774, %v769, %v771
    %v789 = vsel %vm774, %v771, %v773
    %v808 = vadd.f32 %v672, %v775
    %v809 = vadd.f32 %v673, %v776
    %v810 = vadd.f32 %v674, %v777
    %v811 = vadd.f32 %v675, %v778
    %v812 = vadd.f32 %v676, %v779
    %v813 = vadd.f32 %v677, %v749
    %v814 = vadd.f32 %v678, %v780
    %v815 = vadd.f32 %v679, %v781
    %v816 = vadd.f32 %v680, %v782
    %v817 = vadd.f32 %v681, %v783
    %v818 = vadd.f32 %v682, %v784
    %v819 = vadd.f32 %v683, %v761
    %v820 = vadd.f32 %v684, %v785
    %v821 = vadd.f32 %v685, %v786
    %v822 = vadd.f32 %v686, %v787
    %v823 = vadd.f32 %v687, %v788
    %v824 = vadd.f32 %v688, %v789
    %v825 = vadd.f32 %v689, %v773
    %826 = vrot.lane.b32.xlu0 %v403, 8
    %v827 = vpop.permute.xlu0 %826
    %828 = vrot.lane.b32.xlu0 %v404, 8
    %v829 = vpop.permute.xlu0 %828
    %830 = vrot.lane.b32.xlu0 %v405, 8
    %v831 = vpop.permute.xlu0 %830
    %v832 = vsel %vm372, %v827, %v398
    %v833 = vsel %vm372, %v829, %v400
    %v834 = vsel %vm372, %v831, %v402
    %835 = vset.pattern.permute.xlu0 3
    %836 = vperm.xlu0 %835, %v336
    %v837 = vpop.permute.xlu0 %836
    %839 = vset.pattern.permute.xlu0 3
    %840 = vperm.xlu0 %839, %v337
    %v841 = vpop.permute.xlu0 %840
    %843 = vset.pattern.permute.xlu0 3
    %844 = vperm.xlu0 %843, %v338
    %v845 = vpop.permute.xlu0 %844
    %v847 = vmul.f32 %v403, %v837
    %v848 = vmul.f32 %v406, %v837
    %v849 = vmul.f32 %v409, %v837
    %v850 = vmul.f32 %v412, %v837
    %v851 = vmul.f32 %v415, %v837
    %v852 = vmul.f32 %v832, %v837
    %v853 = vmul.f32 %v404, %v841
    %v854 = vmul.f32 %v407, %v841
    %v855 = vmul.f32 %v410, %v841
    %v856 = vmul.f32 %v413, %v841
    %v857 = vmul.f32 %v416, %v841
    %v858 = vmul.f32 %v833, %v841
    %v859 = vmul.f32 %v405, %v845
    %v860 = vmul.f32 %v408, %v845
    %v861 = vmul.f32 %v411, %v845
    %v862 = vmul.f32 %v414, %v845
    %v863 = vmul.f32 %v417, %v845
    %v864 = vmul.f32 %v834, %v845
    %883 = vrot.lane.b32.xlu0 %v847, 121
    %v884 = vpop.permute.xlu0 %883
    %885 = vrot.lane.b32.xlu0 %v848, 121
    %v886 = vpop.permute.xlu0 %885
    %887 = vrot.lane.b32.xlu0 %v849, 121
    %v888 = vpop.permute.xlu0 %887
    %889 = vrot.lane.b32.xlu0 %v850, 121
    %v890 = vpop.permute.xlu0 %889
    %891 = vrot.lane.b32.xlu0 %v851, 121
    %v892 = vpop.permute.xlu0 %891
    %893 = vrot.lane.b32.xlu0 %v852, 121
    %v894 = vpop.permute.xlu0 %893
    %895 = vrot.lane.b32.xlu0 %v853, 121
    %v896 = vpop.permute.xlu0 %895
    %897 = vrot.lane.b32.xlu0 %v854, 121
    %v898 = vpop.permute.xlu0 %897
    %899 = vrot.lane.b32.xlu0 %v855, 121
    %v900 = vpop.permute.xlu0 %899
    %901 = vrot.lane.b32.xlu0 %v856, 121
    %v902 = vpop.permute.xlu0 %901
    %903 = vrot.lane.b32.xlu0 %v857, 121
    %v904 = vpop.permute.xlu0 %903
    %905 = vrot.lane.b32.xlu0 %v858, 121
    %v906 = vpop.permute.xlu0 %905
    %907 = vrot.lane.b32.xlu0 %v859, 121
    %v908 = vpop.permute.xlu0 %907
    %909 = vrot.lane.b32.xlu0 %v860, 121
    %v910 = vpop.permute.xlu0 %909
    %911 = vrot.lane.b32.xlu0 %v861, 121
    %v912 = vpop.permute.xlu0 %911
    %913 = vrot.lane.b32.xlu0 %v862, 121
    %v914 = vpop.permute.xlu0 %913
    %915 = vrot.lane.b32.xlu0 %v863, 121
    %v916 = vpop.permute.xlu0 %915
    %917 = vrot.lane.b32.xlu0 %v864, 121
    %v918 = vpop.permute.xlu0 %917
    %vm919 = vcmask 990208
    %v920 = vsel %vm919, %v884, %v886
    %v921 = vsel %vm919, %v886, %v888
    %v922 = vsel %vm919, %v888, %v890
    %v923 = vsel %vm919, %v890, %v892
    %v924 = vsel %vm919, %v892, %v894
    %v925 = vsel %vm919, %v896, %v898
    %v926 = vsel %vm919, %v898, %v900
    %v927 = vsel %vm919, %v900, %v902
    %v928 = vsel %vm919, %v902, %v904
    %v929 = vsel %vm919, %v904, %v906
    %v930 = vsel %vm919, %v908, %v910
    %v931 = vsel %vm919, %v910, %v912
    %v932 = vsel %vm919, %v912, %v914
    %v933 = vsel %vm919, %v914, %v916
    %v934 = vsel %vm919, %v916, %v918
    %v953 = vadd.f32 %v808, %v920
    %v954 = vadd.f32 %v809, %v921
    %v955 = vadd.f32 %v810, %v922
    %v956 = vadd.f32 %v811, %v923
    %v957 = vadd.f32 %v812, %v924
    %v958 = vadd.f32 %v813, %v894
    %v959 = vadd.f32 %v814, %v925
    %v960 = vadd.f32 %v815, %v926
    %v961 = vadd.f32 %v816, %v927
    %v962 = vadd.f32 %v817, %v928
    %v963 = vadd.f32 %v818, %v929
    %v964 = vadd.f32 %v819, %v906
    %v965 = vadd.f32 %v820, %v930
    %v966 = vadd.f32 %v821, %v931
    %v967 = vadd.f32 %v822, %v932
    %v968 = vadd.f32 %v823, %v933
    %v969 = vadd.f32 %v824, %v934
    %v970 = vadd.f32 %v825, %v918
    %971 = vset.pattern.permute.xlu0 5
    %972 = vperm.xlu0 %971, %v336
    %v973 = vpop.permute.xlu0 %972
    %975 = vset.pattern.permute.xlu0 5
    %976 = vperm.xlu0 %975, %v337
    %v977 = vpop.permute.xlu0 %976
    %979 = vset.pattern.permute.xlu0 5
    %980 = vperm.xlu0 %979, %v338
    %v981 = vpop.permute.xlu0 %980
    %v983 = vmul.f32 %v318, %v973
    %v984 = vmul.f32 %v319, %v973
    %v985 = vmul.f32 %v320, %v973
    %v986 = vmul.f32 %v321, %v973
    %v987 = vmul.f32 %v322, %v973
    %v988 = vmul.f32 %v403, %v973
    %v989 = vmul.f32 %v324, %v977
    %v990 = vmul.f32 %v325, %v977
    %v991 = vmul.f32 %v326, %v977
    %v992 = vmul.f32 %v327, %v977
    %v993 = vmul.f32 %v328, %v977
    %v994 = vmul.f32 %v404, %v977
    %v995 = vmul.f32 %v330, %v981
    %v996 = vmul.f32 %v331, %v981
    %v997 = vmul.f32 %v332, %v981
    %v998 = vmul.f32 %v333, %v981
    %v999 = vmul.f32 %v334, %v981
    %v1000 = vmul.f32 %v405, %v981
    %1019 = vrot.lane.b32.xlu0 %v983, 127
    %v1020 = vpop.permute.xlu0 %1019
    %1021 = vrot.lane.b32.xlu0 %v984, 127
    %v1022 = vpop.permute.xlu0 %1021
    %1023 = vrot.lane.b32.xlu0 %v985, 127
    %v1024 = vpop.permute.xlu0 %1023
    %1025 = vrot.lane.b32.xlu0 %v986, 127
    %v1026 = vpop.permute.xlu0 %1025
    %1027 = vrot.lane.b32.xlu0 %v987, 127
    %v1028 = vpop.permute.xlu0 %1027
    %1029 = vrot.lane.b32.xlu0 %v988, 127
    %v1030 = vpop.permute.xlu0 %1029
    %1031 = vrot.lane.b32.xlu0 %v989, 127
    %v1032 = vpop.permute.xlu0 %1031
    %1033 = vrot.lane.b32.xlu0 %v990, 127
    %v1034 = vpop.permute.xlu0 %1033
    %1035 = vrot.lane.b32.xlu0 %v991, 127
    %v1036 = vpop.permute.xlu0 %1035
    %1037 = vrot.lane.b32.xlu0 %v992, 127
    %v1038 = vpop.permute.xlu0 %1037
    %1039 = vrot.lane.b32.xlu0 %v993, 127
    %v1040 = vpop.permute.xlu0 %1039
    %1041 = vrot.lane.b32.xlu0 %v994, 127
    %v1042 = vpop.permute.xlu0 %1041
    %1043 = vrot.lane.b32.xlu0 %v995, 127
    %v1044 = vpop.permute.xlu0 %1043
    %1045 = vrot.lane.b32.xlu0 %v996, 127
    %v1046 = vpop.permute.xlu0 %1045
    %1047 = vrot.lane.b32.xlu0 %v997, 127
    %v1048 = vpop.permute.xlu0 %1047
    %1049 = vrot.lane.b32.xlu0 %v998, 127
    %v1050 = vpop.permute.xlu0 %1049
    %1051 = vrot.lane.b32.xlu0 %v999, 127
    %v1052 = vpop.permute.xlu0 %1051
    %1053 = vrot.lane.b32.xlu0 %v1000, 127
    %v1054 = vpop.permute.xlu0 %1053
    %vm1055 = vcmask 1039360
    %v1056 = vsel %vm1055, %v1020, %v1022
    %v1057 = vsel %vm1055, %v1022, %v1024
    %v1058 = vsel %vm1055, %v1024, %v1026
    %v1059 = vsel %vm1055, %v1026, %v1028
    %v1060 = vsel %vm1055, %v1028, %v1030
    %v1061 = vsel %vm1055, %v1032, %v1034
    %v1062 = vsel %vm1055, %v1034, %v1036
    %v1063 = vsel %vm1055, %v1036, %v1038
    %v1064 = vsel %vm1055, %v1038, %v1040
    %v1065 = vsel %vm1055, %v1040, %v1042
    %v1066 = vsel %vm1055, %v1044, %v1046
    %v1067 = vsel %vm1055, %v1046, %v1048
    %v1068 = vsel %vm1055, %v1048, %v1050
    %v1069 = vsel %vm1055, %v1050, %v1052
    %v1070 = vsel %vm1055, %v1052, %v1054
    %v1089 = vadd.f32 %v953, %v1056
    %v1090 = vadd.f32 %v954, %v1057
    %v1091 = vadd.f32 %v955, %v1058
    %v1092 = vadd.f32 %v956, %v1059
    %v1093 = vadd.f32 %v957, %v1060
    %v1094 = vadd.f32 %v958, %v1030
    %v1095 = vadd.f32 %v959, %v1061
    %v1096 = vadd.f32 %v960, %v1062
    %v1097 = vadd.f32 %v961, %v1063
    %v1098 = vadd.f32 %v962, %v1064
    %v1099 = vadd.f32 %v963, %v1065
    %v1100 = vadd.f32 %v964, %v1042
    %v1101 = vadd.f32 %v965, %v1066
    %v1102 = vadd.f32 %v966, %v1067
    %v1103 = vadd.f32 %v967, %v1068
    %v1104 = vadd.f32 %v968, %v1069
    %v1105 = vadd.f32 %v969, %v1070
    %v1106 = vadd.f32 %v970, %v1054
    %1107 = vset.pattern.permute.xlu0 6
    %1108 = vperm.xlu0 %1107, %v336
    %v1109 = vpop.permute.xlu0 %1108
    %1111 = vset.pattern.permute.xlu0 6
    %1112 = vperm.xlu0 %1111, %v337
    %v1113 = vpop.permute.xlu0 %1112
    %1115 = vset.pattern.permute.xlu0 6
    %1116 = vperm.xlu0 %1115, %v338
    %v1117 = vpop.permute.xlu0 %1116
    %v1119 = vmul.f32 %v318, %v1109
    %v1120 = vmul.f32 %v319, %v1109
    %v1121 = vmul.f32 %v320, %v1109
    %v1122 = vmul.f32 %v321, %v1109
    %v1123 = vmul.f32 %v322, %v1109
    %v1124 = vmul.f32 %v403, %v1109
    %v1125 = vmul.f32 %v324, %v1113
    %v1126 = vmul.f32 %v325, %v1113
    %v1127 = vmul.f32 %v326, %v1113
    %v1128 = vmul.f32 %v327, %v1113
    %v1129 = vmul.f32 %v328, %v1113
    %v1130 = vmul.f32 %v404, %v1113
    %v1131 = vmul.f32 %v330, %v1117
    %v1132 = vmul.f32 %v331, %v1117
    %v1133 = vmul.f32 %v332, %v1117
    %v1134 = vmul.f32 %v333, %v1117
    %v1135 = vmul.f32 %v334, %v1117
    %v1136 = vmul.f32 %v405, %v1117
    %1155 = vrot.lane.b32.xlu0 %v1119, 111
    %v1156 = vpop.permute.xlu0 %1155
    %1157 = vrot.lane.b32.xlu0 %v1120, 111
    %v1158 = vpop.permute.xlu0 %1157
    %1159 = vrot.lane.b32.xlu0 %v1121, 111
    %v1160 = vpop.permute.xlu0 %1159
    %1161 = vrot.lane.b32.xlu0 %v1122, 111
    %v1162 = vpop.permute.xlu0 %1161
    %1163 = vrot.lane.b32.xlu0 %v1123, 111
    %v1164 = vpop.permute.xlu0 %1163
    %1165 = vrot.lane.b32.xlu0 %v1124, 111
    %v1166 = vpop.permute.xlu0 %1165
    %1167 = vrot.lane.b32.xlu0 %v1125, 111
    %v1168 = vpop.permute.xlu0 %1167
    %1169 = vrot.lane.b32.xlu0 %v1126, 111
    %v1170 = vpop.permute.xlu0 %1169
    %1171 = vrot.lane.b32.xlu0 %v1127, 111
    %v1172 = vpop.permute.xlu0 %1171
    %1173 = vrot.lane.b32.xlu0 %v1128, 111
    %v1174 = vpop.permute.xlu0 %1173
    %1175 = vrot.lane.b32.xlu0 %v1129, 111
    %v1176 = vpop.permute.xlu0 %1175
    %1177 = vrot.lane.b32.xlu0 %v1130, 111
    %v1178 = vpop.permute.xlu0 %1177
    %1179 = vrot.lane.b32.xlu0 %v1131, 111
    %v1180 = vpop.permute.xlu0 %1179
    %1181 = vrot.lane.b32.xlu0 %v1132, 111
    %v1182 = vpop.permute.xlu0 %1181
    %1183 = vrot.lane.b32.xlu0 %v1133, 111
    %v1184 = vpop.permute.xlu0 %1183
    %1185 = vrot.lane.b32.xlu0 %v1134, 111
    %v1186 = vpop.permute.xlu0 %1185
    %1187 = vrot.lane.b32.xlu0 %v1135, 111
    %v1188 = vpop.permute.xlu0 %1187
    %1189 = vrot.lane.b32.xlu0 %v1136, 111
    %v1190 = vpop.permute.xlu0 %1189
    %vm1191 = vcmask 908288
    %v1192 = vsel %vm1191, %v1156, %v1158
    %v1193 = vsel %vm1191, %v1158, %v1160
    %v1194 = vsel %vm1191, %v1160, %v1162
    %v1195 = vsel %vm1191, %v1162, %v1164
    %v1196 = vsel %vm1191, %v1164, %v1166
    %v1197 = vsel %vm1191, %v1168, %v1170
    %v1198 = vsel %vm1191, %v1170, %v1172
    %v1199 = vsel %vm1191, %v1172, %v1174
    %v1200 = vsel %vm1191, %v1174, %v1176
    %v1201 = vsel %vm1191, %v1176, %v1178
    %v1202 = vsel %vm1191, %v1180, %v1182
    %v1203 = vsel %vm1191, %v1182, %v1184
    %v1204 = vsel %vm1191, %v1184, %v1186
    %v1205 = vsel %vm1191, %v1186, %v1188
    %v1206 = vsel %vm1191, %v1188, %v1190
    %v1225 = vadd.f32 %v1089, %v1192
    %v1226 = vadd.f32 %v1090, %v1193
    %v1227 = vadd.f32 %v1091, %v1194
    %v1228 = vadd.f32 %v1092, %v1195
    %v1229 = vadd.f32 %v1093, %v1196
    %v1230 = vadd.f32 %v1094, %v1166
    %v1231 = vadd.f32 %v1095, %v1197
    %v1232 = vadd.f32 %v1096, %v1198
    %v1233 = vadd.f32 %v1097, %v1199
    %v1234 = vadd.f32 %v1098, %v1200
    %v1235 = vadd.f32 %v1099, %v1201
    %v1236 = vadd.f32 %v1100, %v1178
    %v1237 = vadd.f32 %v1101, %v1202
    %v1238 = vadd.f32 %v1102, %v1203
    %v1239 = vadd.f32 %v1103, %v1204
    %v1240 = vadd.f32 %v1104, %v1205
    %v1241 = vadd.f32 %v1105, %v1206
    %v1242 = vadd.f32 %v1106, %v1190
    %1243 = vset.pattern.permute.xlu0 7
    %1244 = vperm.xlu0 %1243, %v336
    %v1245 = vpop.permute.xlu0 %1244
    %1247 = vset.pattern.permute.xlu0 7
    %1248 = vperm.xlu0 %1247, %v337
    %v1249 = vpop.permute.xlu0 %1248
    %1251 = vset.pattern.permute.xlu0 7
    %1252 = vperm.xlu0 %1251, %v338
    %v1253 = vpop.permute.xlu0 %1252
    %v1255 = vmul.f32 %v318, %v1245
    %v1256 = vmul.f32 %v319, %v1245
    %v1257 = vmul.f32 %v320, %v1245
    %v1258 = vmul.f32 %v321, %v1245
    %v1259 = vmul.f32 %v322, %v1245
    %v1260 = vmul.f32 %v403, %v1245
    %v1261 = vmul.f32 %v324, %v1249
    %v1262 = vmul.f32 %v325, %v1249
    %v1263 = vmul.f32 %v326, %v1249
    %v1264 = vmul.f32 %v327, %v1249
    %v1265 = vmul.f32 %v328, %v1249
    %v1266 = vmul.f32 %v404, %v1249
    %v1267 = vmul.f32 %v330, %v1253
    %v1268 = vmul.f32 %v331, %v1253
    %v1269 = vmul.f32 %v332, %v1253
    %v1270 = vmul.f32 %v333, %v1253
    %v1271 = vmul.f32 %v334, %v1253
    %v1272 = vmul.f32 %v405, %v1253
    %1291 = vrot.lane.b32.xlu0 %v1255, 110
    %v1292 = vpop.permute.xlu0 %1291
    %1293 = vrot.lane.b32.xlu0 %v1256, 110
    %v1294 = vpop.permute.xlu0 %1293
    %1295 = vrot.lane.b32.xlu0 %v1257, 110
    %v1296 = vpop.permute.xlu0 %1295
    %1297 = vrot.lane.b32.xlu0 %v1258, 110
    %v1298 = vpop.permute.xlu0 %1297
    %1299 = vrot.lane.b32.xlu0 %v1259, 110
    %v1300 = vpop.permute.xlu0 %1299
    %1301 = vrot.lane.b32.xlu0 %v1260, 110
    %v1302 = vpop.permute.xlu0 %1301
    %1303 = vrot.lane.b32.xlu0 %v1261, 110
    %v1304 = vpop.permute.xlu0 %1303
    %1305 = vrot.lane.b32.xlu0 %v1262, 110
    %v1306 = vpop.permute.xlu0 %1305
    %1307 = vrot.lane.b32.xlu0 %v1263, 110
    %v1308 = vpop.permute.xlu0 %1307
    %1309 = vrot.lane.b32.xlu0 %v1264, 110
    %v1310 = vpop.permute.xlu0 %1309
    %1311 = vrot.lane.b32.xlu0 %v1265, 110
    %v1312 = vpop.permute.xlu0 %1311
    %1313 = vrot.lane.b32.xlu0 %v1266, 110
    %v1314 = vpop.permute.xlu0 %1313
    %1315 = vrot.lane.b32.xlu0 %v1267, 110
    %v1316 = vpop.permute.xlu0 %1315
    %1317 = vrot.lane.b32.xlu0 %v1268, 110
    %v1318 = vpop.permute.xlu0 %1317
    %1319 = vrot.lane.b32.xlu0 %v1269, 110
    %v1320 = vpop.permute.xlu0 %1319
    %1321 = vrot.lane.b32.xlu0 %v1270, 110
    %v1322 = vpop.permute.xlu0 %1321
    %1323 = vrot.lane.b32.xlu0 %v1271, 110
    %v1324 = vpop.permute.xlu0 %1323
    %1325 = vrot.lane.b32.xlu0 %v1272, 110
    %v1326 = vpop.permute.xlu0 %1325
    %vm1327 = vcmask 900096
    %v1328 = vsel %vm1327, %v1292, %v1294
    %v1329 = vsel %vm1327, %v1294, %v1296
    %v1330 = vsel %vm1327, %v1296, %v1298
    %v1331 = vsel %vm1327, %v1298, %v1300
    %v1332 = vsel %vm1327, %v1300, %v1302
    %v1333 = vsel %vm1327, %v1304, %v1306
    %v1334 = vsel %vm1327, %v1306, %v1308
    %v1335 = vsel %vm1327, %v1308, %v1310
    %v1336 = vsel %vm1327, %v1310, %v1312
    %v1337 = vsel %vm1327, %v1312, %v1314
    %v1338 = vsel %vm1327, %v1316, %v1318
    %v1339 = vsel %vm1327, %v1318, %v1320
    %v1340 = vsel %vm1327, %v1320, %v1322
    %v1341 = vsel %vm1327, %v1322, %v1324
    %v1342 = vsel %vm1327, %v1324, %v1326
    %v1361 = vadd.f32 %v1225, %v1328
    %v1362 = vadd.f32 %v1226, %v1329
    %v1363 = vadd.f32 %v1227, %v1330
    %v1364 = vadd.f32 %v1228, %v1331
    %v1365 = vadd.f32 %v1229, %v1332
    %v1366 = vadd.f32 %v1230, %v1302
    %v1367 = vadd.f32 %v1231, %v1333
    %v1368 = vadd.f32 %v1232, %v1334
    %v1369 = vadd.f32 %v1233, %v1335
    %v1370 = vadd.f32 %v1234, %v1336
    %v1371 = vadd.f32 %v1235, %v1337
    %v1372 = vadd.f32 %v1236, %v1314
    %v1373 = vadd.f32 %v1237, %v1338
    %v1374 = vadd.f32 %v1238, %v1339
    %v1375 = vadd.f32 %v1239, %v1340
    %v1376 = vadd.f32 %v1240, %v1341
    %v1377 = vadd.f32 %v1241, %v1342
    %v1378 = vadd.f32 %v1242, %v1326
    %1379 = vset.pattern.permute.xlu0 8
    %1380 = vperm.xlu0 %1379, %v336
    %v1381 = vpop.permute.xlu0 %1380
    %1383 = vset.pattern.permute.xlu0 8
    %1384 = vperm.xlu0 %1383, %v337
    %v1385 = vpop.permute.xlu0 %1384
    %1387 = vset.pattern.permute.xlu0 8
    %1388 = vperm.xlu0 %1387, %v338
    %v1389 = vpop.permute.xlu0 %1388
    %v1391 = vmul.f32 %v318, %v1381
    %v1392 = vmul.f32 %v319, %v1381
    %v1393 = vmul.f32 %v320, %v1381
    %v1394 = vmul.f32 %v321, %v1381
    %v1395 = vmul.f32 %v322, %v1381
    %v1396 = vmul.f32 %v403, %v1381
    %v1397 = vmul.f32 %v324, %v1385
    %v1398 = vmul.f32 %v325, %v1385
    %v1399 = vmul.f32 %v326, %v1385
    %v1400 = vmul.f32 %v327, %v1385
    %v1401 = vmul.f32 %v328, %v1385
    %v1402 = vmul.f32 %v404, %v1385
    %v1403 = vmul.f32 %v330, %v1389
    %v1404 = vmul.f32 %v331, %v1389
    %v1405 = vmul.f32 %v332, %v1389
    %v1406 = vmul.f32 %v333, %v1389
    %v1407 = vmul.f32 %v334, %v1389
    %v1408 = vmul.f32 %v405, %v1389
    %1427 = vrot.lane.b32.xlu0 %v1391, 109
    %v1428 = vpop.permute.xlu0 %1427
    %1429 = vrot.lane.b32.xlu0 %v1392, 109
    %v1430 = vpop.permute.xlu0 %1429
    %1431 = vrot.lane.b32.xlu0 %v1393, 109
    %v1432 = vpop.permute.xlu0 %1431
    %1433 = vrot.lane.b32.xlu0 %v1394, 109
    %v1434 = vpop.permute.xlu0 %1433
    %1435 = vrot.lane.b32.xlu0 %v1395, 109
    %v1436 = vpop.permute.xlu0 %1435
    %1437 = vrot.lane.b32.xlu0 %v1396, 109
    %v1438 = vpop.permute.xlu0 %1437
    %1439 = vrot.lane.b32.xlu0 %v1397, 109
    %v1440 = vpop.permute.xlu0 %1439
    %1441 = vrot.lane.b32.xlu0 %v1398, 109
    %v1442 = vpop.permute.xlu0 %1441
    %1443 = vrot.lane.b32.xlu0 %v1399, 109
    %v1444 = vpop.permute.xlu0 %1443
    %1445 = vrot.lane.b32.xlu0 %v1400, 109
    %v1446 = vpop.permute.xlu0 %1445
    %1447 = vrot.lane.b32.xlu0 %v1401, 109
    %v1448 = vpop.permute.xlu0 %1447
    %1449 = vrot.lane.b32.xlu0 %v1402, 109
    %v1450 = vpop.permute.xlu0 %1449
    %1451 = vrot.lane.b32.xlu0 %v1403, 109
    %v1452 = vpop.permute.xlu0 %1451
    %1453 = vrot.lane.b32.xlu0 %v1404, 109
    %v1454 = vpop.permute.xlu0 %1453
    %1455 = vrot.lane.b32.xlu0 %v1405, 109
    %v1456 = vpop.permute.xlu0 %1455
    %1457 = vrot.lane.b32.xlu0 %v1406, 109
    %v1458 = vpop.permute.xlu0 %1457
    %1459 = vrot.lane.b32.xlu0 %v1407, 109
    %v1460 = vpop.permute.xlu0 %1459
    %1461 = vrot.lane.b32.xlu0 %v1408, 109
    %v1462 = vpop.permute.xlu0 %1461
    %vm1463 = vcmask 891904
    %v1464 = vsel %vm1463, %v1428, %v1430
    %v1465 = vsel %vm1463, %v1430, %v1432
    %v1466 = vsel %vm1463, %v1432, %v1434
    %v1467 = vsel %vm1463, %v1434, %v1436
    %v1468 = vsel %vm1463, %v1436, %v1438
    %v1469 = vsel %vm1463, %v1440, %v1442
    %v1470 = vsel %vm1463, %v1442, %v1444
    %v1471 = vsel %vm1463, %v1444, %v1446
    %v1472 = vsel %vm1463, %v1446, %v1448
    %v1473 = vsel %vm1463, %v1448, %v1450
    %v1474 = vsel %vm1463, %v1452, %v1454
    %v1475 = vsel %vm1463, %v1454, %v1456
    %v1476 = vsel %vm1463, %v1456, %v1458
    %v1477 = vsel %vm1463, %v1458, %v1460
    %v1478 = vsel %vm1463, %v1460, %v1462
    %v1497 = vadd.f32 %v1361, %v1464
    %v1498 = vadd.f32 %v1362, %v1465
    %v1499 = vadd.f32 %v1363, %v1466
    %v1500 = vadd.f32 %v1364, %v1467
    %v1501 = vadd.f32 %v1365, %v1468
    %v1502 = vadd.f32 %v1366, %v1438
    %v1503 = vadd.f32 %v1367, %v1469
    %v1504 = vadd.f32 %v1368, %v1470
    %v1505 = vadd.f32 %v1369, %v1471
    %v1506 = vadd.f32 %v1370, %v1472
    %v1507 = vadd.f32 %v1371, %v1473
    %v1508 = vadd.f32 %v1372, %v1450
    %v1509 = vadd.f32 %v1373, %v1474
    %v1510 = vadd.f32 %v1374, %v1475
    %v1511 = vadd.f32 %v1375, %v1476
    %v1512 = vadd.f32 %v1376, %v1477
    %v1513 = vadd.f32 %v1377, %v1478
    %v1514 = vadd.f32 %v1378, %v1462
    %v1515 = vld [vmem:[%s4] sm:$0xff]
    %v1516 = vld [vmem:[%s4 + $0x8] sm:$0xff]
    %v1517 = vld [vmem:[%s4 + $0x10] sm:$0xff]
    %1519 = vset.pattern.permute.xlu0 0
    %1520 = vperm.xlu0 %1519, %v1515
    %v1521 = vpop.permute.xlu0 %1520
    %1524 = vset.pattern.permute.xlu0 0
    %1525 = vperm.xlu0 %1524, %v1516
    %v1526 = vpop.permute.xlu0 %1525
    %1529 = vset.pattern.permute.xlu0 0
    %1530 = vperm.xlu0 %1529, %v1517
    %v1531 = vpop.permute.xlu0 %1530
    %v1533 = vadd.f32 %v1497, %v1521
    %v1534 = vadd.f32 %v1498, %v1521
    %v1535 = vadd.f32 %v1499, %v1521
    %v1536 = vadd.f32 %v1500, %v1521
    %v1537 = vadd.f32 %v1501, %v1521
    %v1538 = vadd.f32 %v1502, %v1521
    %v1539 = vadd.f32 %v1503, %v1526
    %v1540 = vadd.f32 %v1504, %v1526
    %v1541 = vadd.f32 %v1505, %v1526
    %v1542 = vadd.f32 %v1506, %v1526
    %v1543 = vadd.f32 %v1507, %v1526
    %v1544 = vadd.f32 %v1508, %v1526
    %v1545 = vadd.f32 %v1509, %v1531
    %v1546 = vadd.f32 %v1510, %v1531
    %v1547 = vadd.f32 %v1511, %v1531
    %v1548 = vadd.f32 %v1512, %v1531
    %v1549 = vadd.f32 %v1513, %v1531
    %v1550 = vadd.f32 %v1514, %v1531
    %v1551 = vmax.f32 %v1533, 0.0
    %v1552 = vmax.f32 %v1534, 0.0
    %v1553 = vmax.f32 %v1535, 0.0
    %v1554 = vmax.f32 %v1536, 0.0
    %v1555 = vmax.f32 %v1537, 0.0
    %v1556 = vmax.f32 %v1538, 0.0
    %v1557 = vmax.f32 %v1539, 0.0
    %v1558 = vmax.f32 %v1540, 0.0
    %v1559 = vmax.f32 %v1541, 0.0
    %v1560 = vmax.f32 %v1542, 0.0
    %v1561 = vmax.f32 %v1543, 0.0
    %v1562 = vmax.f32 %v1544, 0.0
    %v1563 = vmax.f32 %v1545, 0.0
    %v1564 = vmax.f32 %v1546, 0.0
    %v1565 = vmax.f32 %v1547, 0.0
    %v1566 = vmax.f32 %v1548, 0.0
    %v1567 = vmax.f32 %v1549, 0.0
    %v1568 = vmax.f32 %v1550, 0.0
    %v1569 = vld [vmem:[%s5] sm:$0x3]
    %v1570 = vpack.c.bf16 %v1557, %v1551
    %v1571 = vpack.c.bf16 %v1558, %v1552
    %v1572 = vpack.c.bf16 %v1559, %v1553
    %v1573 = vpack.c.bf16 %v1560, %v1554
    %v1574 = vpack.c.bf16 %v1561, %v1555
    %v1575 = vpack.c.bf16 %v1562, %v1556
    %v1576 = vpack.c.bf16 %v1563, %v1563
    %v1577 = vpack.c.bf16 %v1564, %v1564
    %v1578 = vpack.c.bf16 %v1565, %v1565
    %v1579 = vpack.c.bf16 %v1566, %v1566
    %v1580 = vpack.c.bf16 %v1567, %v1567
    %v1581 = vpack.c.bf16 %v1568, %v1568
    %v1582 = vld [vmem:[%s6] sm:$0xf]
    %1584 = vset.pattern.permute.xlu0 0
    %1585 = vperm.xlu0 %1584, %v1582
    %v1586 = vpop.permute.xlu0 %1585
    %vm1588 = vcmask 195584
    %v1590 = vsel %vm1588, %v1569, 0
    %vm1592 = vcmask 1043456
    %v1594 = vsel %vm1592, %v1576, 0
    %v1597 = vsel %vm1592, %v1577, 0
    %v1600 = vsel %vm1592, %v1578, 0
    %v1603 = vsel %vm1592, %v1579, 0
    %v1606 = vsel %vm1592, %v1580, 0
    %v1609 = vsel %vm1592, %v1581, 0
    %1611 = vmatprep.subr.bf16.mxu0 0
    %1612 = vmatpush1.bf16.msra.mxu0 0
    %1613 = vmatprep.subr.bf16.mxu0 0
    %1614 = vmatpush1.bf16.msra.mxu0 0
    %1615 = vmatprep.subr.bf16.mxu0 0
    %1616 = vmatpush1.bf16.msra.mxu0 0
    %1617 = vmatprep.subr.bf16.mxu0 0
    %1618 = vmatpush1.bf16.msra.mxu0 0
    %1619 = vmatprep.subr.bf16.mxu0 0
    %1620 = vmatpush1.bf16.msra.mxu0 0
    %1621 = vmatprep.subr.bf16.mxu0 0
    %1622 = vmatpush1.bf16.msra.mxu0 0
    %1623 = vmatprep.subr.bf16.mxu0 %v1597
    %1624 = vmatpush1.bf16.msra.mxu0 %v1594
    %1625 = vmatprep.subr.bf16.mxu0 %v1571
    %1626 = vmatpush1.bf16.msra.mxu0 %v1570
    %1627 = vmatprep.subr.bf16.mxu0 0
    %1628 = vmatpush2.bf16.msra.mxu0 0
    %1629 = vmatprep.subr.bf16.mxu0 0
    %1630 = vmatpush2.bf16.msra.mxu0 0
    %1631 = vmatprep.subr.bf16.mxu0 0
    %1632 = vmatpush2.bf16.msra.mxu0 0
    %1633 = vmatprep.subr.bf16.mxu0 0
    %1634 = vmatpush2.bf16.msra.mxu0 0
    %1635 = vmatprep.subr.bf16.mxu0 0
    %1636 = vmatpush2.bf16.msra.mxu0 0
    %1637 = vmatprep.subr.bf16.mxu0 0
    %1638 = vmatpush2.bf16.msra.mxu0 0
    %1639 = vmatprep.subr.bf16.mxu0 0
    %1640 = vmatpush2.bf16.msra.mxu0 0
    %1641 = vmatprep.subr.bf16.mxu0 0
    %1642 = vmatpush2.bf16.msra.mxu0 0
    %1643 = vmatprep.mubr.bf16.mxu0 0
    %1644 = vmatmul.mubr.bf16.gmra.mxu0 %v1590
    %v1645 = vpop.f32.mrf.mxu0
    %v1646 = vadd.f32 %v1586, %v1645
    %v1647 = vpop.f32.mrf.mxu0
    %v1648 = vadd.f32 %v1586, %v1647
    %v1649 = vpop.f32.mrf.mxu0
    %v1650 = vpop.f32.mrf.mxu0
    %1651 = vdwg.mxu0
    %1652 = vmatprep.subr.bf16.mxu0 0
    %1653 = vmatpush1.bf16.msra.mxu0 0
    %1654 = vmatprep.subr.bf16.mxu0 0
    %1655 = vmatpush1.bf16.msra.mxu0 0
    %1656 = vmatprep.subr.bf16.mxu0 0
    %1657 = vmatpush1.bf16.msra.mxu0 0
    %1658 = vmatprep.subr.bf16.mxu0 0
    %1659 = vmatpush1.bf16.msra.mxu0 0
    %1660 = vmatprep.subr.bf16.mxu0 0
    %1661 = vmatpush1.bf16.msra.mxu0 0
    %1662 = vmatprep.subr.bf16.mxu0 0
    %1663 = vmatpush1.bf16.msra.mxu0 0
    %1664 = vmatprep.subr.bf16.mxu0 %v1603
    %1665 = vmatpush1.bf16.msra.mxu0 %v1600
    %1666 = vmatprep.subr.bf16.mxu0 %v1573
    %1667 = vmatpush1.bf16.msra.mxu0 %v1572
    %1668 = vmatprep.subr.bf16.mxu0 0
    %1669 = vmatpush2.bf16.msra.mxu0 0
    %1670 = vmatprep.subr.bf16.mxu0 0
    %1671 = vmatpush2.bf16.msra.mxu0 0
    %1672 = vmatprep.subr.bf16.mxu0 0
    %1673 = vmatpush2.bf16.msra.mxu0 0
    %1674 = vmatprep.subr.bf16.mxu0 0
    %1675 = vmatpush2.bf16.msra.mxu0 0
    %1676 = vmatprep.subr.bf16.mxu0 0
    %1677 = vmatpush2.bf16.msra.mxu0 0
    %1678 = vmatprep.subr.bf16.mxu0 0
    %1679 = vmatpush2.bf16.msra.mxu0 0
    %1680 = vmatprep.subr.bf16.mxu0 0
    %1681 = vmatpush2.bf16.msra.mxu0 0
    %1682 = vmatprep.subr.bf16.mxu0 0
    %1683 = vmatpush2.bf16.msra.mxu0 0
    %1684 = vmatprep.mubr.bf16.mxu0 0
    %1685 = vmatmul.mubr.bf16.gmra.mxu0 %v1590
    %v1686 = vpop.f32.mrf.mxu0
    %v1687 = vadd.f32 %v1586, %v1686
    %v1688 = vpop.f32.mrf.mxu0
    %v1689 = vadd.f32 %v1586, %v1688
    %v1690 = vpop.f32.mrf.mxu0
    %v1691 = vpop.f32.mrf.mxu0
    %1692 = vdwg.mxu0
    %1693 = vmatprep.subr.bf16.mxu0 0
    %1694 = vmatpush1.bf16.msra.mxu0 0
    %1695 = vmatprep.subr.bf16.mxu0 0
    %1696 = vmatpush1.bf16.msra.mxu0 0
    %1697 = vmatprep.subr.bf16.mxu0 0
    %1698 = vmatpush1.bf16.msra.mxu0 0
    %1699 = vmatprep.subr.bf16.mxu0 0
    %1700 = vmatpush1.bf16.msra.mxu0 0
    %1701 = vmatprep.subr.bf16.mxu0 0
    %1702 = vmatpush1.bf16.msra.mxu0 0
    %1703 = vmatprep.subr.bf16.mxu0 0
    %1704 = vmatpush1.bf16.msra.mxu0 0
    %1705 = vmatprep.subr.bf16.mxu0 %v1609
    %1706 = vmatpush1.bf16.msra.mxu0 %v1606
    %1707 = vmatprep.subr.bf16.mxu0 %v1575
    %1708 = vmatpush1.bf16.msra.mxu0 %v1574
    %1709 = vmatprep.subr.bf16.mxu0 0
    %1710 = vmatpush2.bf16.msra.mxu0 0
    %1711 = vmatprep.subr.bf16.mxu0 0
    %1712 = vmatpush2.bf16.msra.mxu0 0
    %1713 = vmatprep.subr.bf16.mxu0 0
    %1714 = vmatpush2.bf16.msra.mxu0 0
    %1715 = vmatprep.subr.bf16.mxu0 0
    %1716 = vmatpush2.bf16.msra.mxu0 0
    %1717 = vmatprep.subr.bf16.mxu0 0
    %1718 = vmatpush2.bf16.msra.mxu0 0
    %1719 = vmatprep.subr.bf16.mxu0 0
    %1720 = vmatpush2.bf16.msra.mxu0 0
    %1721 = vmatprep.subr.bf16.mxu0 0
    %1722 = vmatpush2.bf16.msra.mxu0 0
    %1723 = vmatprep.subr.bf16.mxu0 0
    %1724 = vmatpush2.bf16.msra.mxu0 0
    %1725 = vmatprep.mubr.bf16.mxu0 0
    %1726 = vmatmul.mubr.bf16.gmra.mxu0 %v1590
    %v1727 = vpop.f32.mrf.mxu0
    %v1728 = vadd.f32 %v1586, %v1727
    %v1729 = vpop.f32.mrf.mxu0
    %v1730 = vadd.f32 %v1586, %v1729
    %v1731 = vpop.f32.mrf.mxu0
    %v1732 = vpop.f32.mrf.mxu0
    %1733 = vdwg.mxu0
    %v1734 = vunpack.c.l.bf16 %v31
    %v1735 = vunpack.c.h.bf16 %v31
    %v1736 = vunpack.c.l.bf16 %v32
    %v1740 = vcombine.high %v1734, %v1734
    %v1741 = vcombine.high %v1735, %v1735
    %v1742 = vcombine.high %v1736, %v1736
    %v1746 = vadd.f32 %v1646, %v1734
    %v1747 = vadd.f32 %v1648, %v1740
    %v1748 = vadd.f32 %v1687, %v1735
    %v1749 = vadd.f32 %v1689, %v1741
    %v1750 = vadd.f32 %v1728, %v1736
    %v1751 = vadd.f32 %v1730, %v1742
    %v1758 = vcombine.low %v1746, %v1747
    %v1759 = vcombine.low %v1748, %v1749
    %v1760 = vcombine.low %v1750, %v1751
    %1764 = vst [vmem:[#allocation2] sm:$0xff] %v1758
    %1765 = vst [vmem:[#allocation2 + $0x8] sm:$0xff] %v1759
    %vm1766 = vcmask 64516
    %vm1767 = vmor %vm1766, %vm1592
    %1768 = vst.msk [vmem:[#allocation2 + $0x10] sm:$0xff] %vm1767, %v1760
    // Predicated region
    $region34: #{tpu_custom_call.1} parent=1 // pred_check
      _
    $region35: #{tpu_custom_call.1} parent=1 // pred_check_branch
      %1770 = sbr.rel (0) target = $region37
    $region36: #{tpu_custom_call.1} parent=1 // pred_region
      %s1772 = ssub.s32 384, 384
      %1773 = vsyncadd [#allocation3], %s1772
      %s1775 = sshll.u32 [#allocation2], 4
      %s1776 = int_to_ptr.vmem [resolvable:$true] %s1775
      %1778 = dma.vmem_to_hbm [thread:$0]  %s1776, 384, %s8, [#allocation3]
    $region37: #{tpu_custom_call.1} parent=1 // pred_fallthru
      _
    // Predicated region
    $region38: #{tpu_custom_call.1} parent=1 // pred_check
      _
    $region39: #{tpu_custom_call.1} parent=1 // pred_check_branch
      %1780 = sbr.rel (0) target = $region41
    $region40: #{tpu_custom_call.1} parent=1 // pred_region
      %1781 = dma.done [#allocation3], 384
    $region41: #{tpu_custom_call.1} parent=1 // pred_fallthru
      _
    %1782 = vsyncpa [#allocation3], 1

</llo_original>
